<compile_context>
chip_gen: v7x
topology: tpu7x:2x2x1
jax: 0.10.0
libtpu: 0.0.40
codegen_flags: <defaults>
</compile_context>

<pallas_src>
import math
from functools import partial

import jax
import jax.numpy as jnp
import numpy as np
from jax.experimental import pallas as pl
from jax.experimental.pallas import tpu as pltpu

COMPUTE_DTYPE = jnp.bfloat16     # MXU operand dtype (accumulation is f32)
TILE_T2 = 64                     # output-time rows per conv grid step (mult of 8)
VMEM_LIMIT = 48 * 1024 * 1024    # fits the 64 MiB v7x budget with headroom


# ----------------------------- geometry --------------------------------------

def _conv_geometry(T):
    T1 = (T - 3) // 2 + 1                 # after Conv2d(8,8,3,2)
    T2 = (T1 - 3) // 2 + 1                # after Conv2d(8,8,3,2,groups=8)
    T2pad = -(-T2 // 8) * 8
    TT = min(TILE_T2, T2pad)
    n_tiles = -(-T2 // TT)
    return T1, T2, TT, n_tiles, n_tiles * TT


# ----------------------------- Pallas kernels --------------------------------

def _fused_conv_kernel(x0_ref, x1_ref, x2_ref, x3_ref,
                       a0_ref, a1_ref, a2_ref, b1_ref,
                       c0_ref, c1_ref, c2_ref, b23_ref,
                       wout_ref, bout_ref, o_ref, *, tt):
    """conv1+ReLU -> (conv2*conv3 folded)+ReLU -> frequency Linear, all as 2D matmuls."""
    f32 = jnp.float32
    x0 = x0_ref[0, 0]   # (tt+1, 8*idim) stride-4 phase windows (1-row halo)
    x1 = x1_ref[0, 0]
    x2 = x2_ref[0, 0]
    x3 = x3_ref[0, 0]

    # conv1 (3x3, stride 2) as banded matmuls; even / odd output-time rows.
    h1e = jnp.maximum(
        jnp.dot(x0, a0_ref[...], preferred_element_type=f32)
        + jnp.dot(x1, a1_ref[...], preferred_element_type=f32)
        + jnp.dot(x2, a2_ref[...], preferred_element_type=f32)
        + b1_ref[...], 0.0)                                          # (tt+1, 8*F1)
    h1o = jnp.maximum(
        jnp.dot(x2[:tt], a0_ref[...], preferred_element_type=f32)
        + jnp.dot(x3[:tt], a1_ref[...], preferred_element_type=f32)
        + jnp.dot(x0[1:tt + 1], a2_ref[...], preferred_element_type=f32)
        + b1_ref[...], 0.0)                                          # (tt, 8*F1)
    h1e = h1e.astype(COMPUTE_DTYPE)
    h1o = h1o.astype(COMPUTE_DTYPE)

    # conv2 (depthwise 3x3 s2) folded with conv3 (pointwise 1x1): exact fold.
    h2 = jnp.maximum(
        jnp.dot(h1e[:tt], c0_ref[...], preferred_element_type=f32)
        + jnp.dot(h1o, c1_ref[...], preferred_element_type=f32)
        + jnp.dot(h1e[1:tt + 1], c2_ref[...], preferred_element_type=f32)
        + b23_ref[...], 0.0)                                         # (tt, 8*F2)

    # frequency Linear, block-diagonal over the 8 conv levels -> lane-dense rows.
    q = jnp.dot(h2.astype(COMPUTE_DTYPE), wout_ref[...],
                preferred_element_type=f32) + bout_ref[...]          # (tt, 8*odim)
    o_ref[0] = q.astype(o_ref.dtype)


def _ts_att_posenc_kernel(q_ref, kv_ref, bias_ref,
                          wq_ref, bq_ref, wk_ref, bk_ref, wv_ref, bv_ref,
                          wo_ref, bo_ref, pe_ref, o_ref, *, scale, out_scale):
    """8-head attention (head h queries conv-level h) + PositionalEncoding."""
    f32 = jnp.float32
    q = q_ref[0]            # (H, T, D)   level-major queries
    kv = kv_ref[0]          # (S1, D)     register token + speaker embeddings
    bias = bias_ref[0]      # (T, S1)     additive mask (0 / -1e30)
    H = q.shape[0]
    kvh = jnp.broadcast_to(kv[None], (H,) + kv.shape)                # (H, S1, D)

    # batched per-head projections -- no python head loop, no sub-tile weight slices
    qp = jnp.einsum('htd,hdk->htk', q, wq_ref[...],
                    preferred_element_type=f32) + bq_ref[...]        # (H, T, dk)
    kh = jnp.einsum('hsd,hdk->hsk', kvh, wk_ref[...],
                    preferred_element_type=f32) + bk_ref[...]        # (H, S1, dk)
    vh = jnp.einsum('hsd,hdk->hsk', kvh, wv_ref[...],
                    preferred_element_type=f32) + bv_ref[...]        # (H, S1, dk)

    s = jnp.einsum('htk,hsk->hts', qp, kh,
                   preferred_element_type=f32) * scale + bias[None]  # (H, T, S1)
    m = jnp.max(s, axis=-1, keepdims=True)
    p = jnp.exp(s - m)
    attn = p * pl.reciprocal(jnp.sum(p, axis=-1, keepdims=True), approx=True)

    ctx = jnp.einsum('hts,hsk->htk', attn, vh, preferred_element_type=f32)   # (H,T,dk)
    outh = jnp.einsum('htk,hkd->htd', ctx, wo_ref[...],
                      preferred_element_type=f32)                            # (H,T,D)
    out = jnp.sum(outh, axis=0) + bo_ref[...]                                # (T, D)

    # PositionalEncoding: x * sqrt(d_model) + pe   (dropout omitted: eval mode)
    o_ref[0] = (out * out_scale + pe_ref[...]).astype(o_ref.dtype)


# ----------------------------- wrappers ---------------------------------------

def _fused_conv_subsample(fp, x):
    B, C, T, F = x.shape
    D = fp["odim"]
    _, _, TT, n_tiles, T2cov = fp["geom"]
    K = 8 * F
    F1d = fp["A0"].shape[1]
    F2d = fp["C0"].shape[1]

    # (B, 8, T, F) -> per-time-row feature vectors, then stride-4 phase split with
    # a one-row halo per tile so the kernel never needs strided/halo reads.
    xt = jnp.transpose(x, (0, 2, 1, 3)).reshape(B, T, K).astype(COMPUTE_DTYPE)
    Lp = T2cov + 1

    def phase_windows(r):
        xr = xt[:, r::4, :][:, :Lp]
        xr = jnp.pad(xr, ((0, 0), (0, Lp - xr.shape[1]), (0, 0)))
        base = xr[:, :T2cov].reshape(B, n_tiles, TT, K)
        halo = xr[:, TT:T2cov + 1:TT][:, :, None, :]
        return jnp.concatenate([base, halo], axis=2)      # (B, n_tiles, TT+1, K)

    xw = [phase_windows(r) for r in range(4)]

    x_spec = pl.BlockSpec((1, 1, TT + 1, K), lambda b, i: (b, i, 0, 0))

    def w_spec(shape):
        return pl.BlockSpec(shape, lambda b, i: (0, 0))

    qflat = pl.pallas_call(
        partial(_fused_conv_kernel, tt=TT),
        grid=(B, n_tiles),
        in_specs=[x_spec] * 4 + [
            w_spec((K, F1d)), w_spec((K, F1d)), w_spec((K, F1d)), w_spec((1, F1d)),
            w_spec((F1d, F2d)), w_spec((F1d, F2d)), w_spec((F1d, F2d)), w_spec((1, F2d)),
            w_spec((F2d, 8 * D)), w_spec((1, 8 * D))],
        out_specs=pl.BlockSpec((1, TT, 8 * D), lambda b, i: (b, i, 0)),
        out_shape=jax.ShapeDtypeStruct((B, T2cov, 8 * D), jnp.float32),
        compiler_params=pltpu.CompilerParams(
            dimension_semantics=("parallel", "parallel"),
            vmem_limit_bytes=VMEM_LIMIT),
    )(*xw, fp["A0"], fp["A1"], fp["A2"], fp["b1v"],
      fp["C0"], fp["C1"], fp["C2"], fp["b23v"],
      fp["Wout"], fp["boutv"])
    return qflat                                           # (B, T2cov, 8*D)


def _pallas_ts_att_posenc(fp, qlv, kv, bias, pe):
    B, H, T, D = qlv.shape
    S1 = kv.shape[1]
    dk = D // H
    b4 = lambda b: (b, 0, 0, 0)
    b3 = lambda b: (b, 0, 0)
    w3 = lambda b: (0, 0, 0)
    w2 = lambda b: (0, 0)
    return pl.pallas_call(
        partial(_ts_att_posenc_kernel,
                scale=1.0 / math.sqrt(dk), out_scale=math.sqrt(D)),
        grid=(B,),
        in_specs=[
            pl.BlockSpec((1, H, T, D), b4),
            pl.BlockSpec((1, S1, D), b3),
            pl.BlockSpec((1, T, S1), b3),
            pl.BlockSpec((H, D, dk), w3), pl.BlockSpec((H, 1, dk), w3),
            pl.BlockSpec((H, D, dk), w3), pl.BlockSpec((H, 1, dk), w3),
            pl.BlockSpec((H, D, dk), w3), pl.BlockSpec((H, 1, dk), w3),
            pl.BlockSpec((H, dk, D), w3), pl.BlockSpec((1, D), w2),
            pl.BlockSpec((T, D), w2)],
        out_specs=pl.BlockSpec((1, T, D), b3),
        out_shape=jax.ShapeDtypeStruct((B, T, D), jnp.float32),
        compiler_params=pltpu.CompilerParams(
            dimension_semantics=("parallel",),
            vmem_limit_bytes=VMEM_LIMIT),
    )(qlv, kv, bias, fp["wq_r"], fp["bq_r"], fp["wk_r"], fp["bk_r"],
      fp["wv_r"], fp["bv_r"], fp["wo_r"], fp["bo_r"], pe)


# ----------------------------- params / host-side folding ---------------------

def init_params(key, idim, odim):
    fbins = ((idim - 1) // 2 - 1) // 2          # = in_features of self.out
    ks = jax.random.split(key, 16)
    n = lambda k, shape, s=0.1: (s * jax.random.normal(k, shape)).astype(jnp.float32)
    return dict(
        w1=n(ks[0], (8, 8, 3, 3)),   b1=n(ks[1], (8,)),        # Conv2d(8,8,3,2)
        w2=n(ks[2], (8, 1, 3, 3)),   b2=n(ks[3], (8,)),        # Conv2d(8,8,3,2,groups=8)
        w3=n(ks[4], (8, 8, 1, 1)),   b3=n(ks[5], (8,)),        # Conv2d(8,8,1,1)
        wout=n(ks[6], (fbins, odim)), bout=n(ks[7], (odim,)),  # Linear(fbins, odim)
        wq=n(ks[8], (odim, odim)),   bq=n(ks[9], (odim,)),
        wk=n(ks[10], (odim, odim)),  bk=n(ks[11], (odim,)),
        wv=n(ks[12], (odim, odim)),  bv=n(ks[13], (odim,)),
        wo=n(ks[14], (odim, odim)),  bo=jnp.zeros((odim,), jnp.float32),
        reg=n(ks[15], (odim,)),                                # register K/V token
    )


def _sinusoidal_pe(length, d_model):
    pos = np.arange(length, dtype=np.float32)[:, None]
    div = np.exp(np.arange(0, d_model, 2, dtype=np.float32)
                 * -(math.log(10000.0) / d_model))
    pe = np.zeros((length, d_model), np.float32)
    pe[:, 0::2] = np.sin(pos * div)
    pe[:, 1::2] = np.cos(pos * div)
    return pe


def fold_params(params, idim, odim, T):
    """One-time host-side folding: convs -> banded dense matrices, heads split."""
    assert odim % 8 == 0, "odim must be divisible by the 8 attention heads/levels"
    F = idim
    F1 = (F - 3) // 2 + 1
    F2 = (F1 - 3) // 2 + 1
    D, H = odim, 8
    dk = D // H
    geom = _conv_geometry(T)
    T2cov = geom[4]

    w1 = np.asarray(params["w1"], np.float32)
    b1 = np.asarray(params["b1"], np.float32)
    w2 = np.asarray(params["w2"], np.float32)
    b2 = np.asarray(params["b2"], np.float32)
    w3 = np.asarray(params["w3"], np.float32).reshape(8, 8)
    b3 = np.asarray(params["b3"], np.float32)
    wout = np.asarray(params["wout"], np.float32)
    bout = np.asarray(params["bout"], np.float32)

    # conv1 as banded matrices A[ki]: (8*F) -> (8*F1); rows/cols laid out [chan, freq]
    A = np.zeros((3, 8 * F, 8 * F1), np.float32)
    f1 = np.arange(F1)
    for ki in range(3):
        for kj in range(3):
            for co in range(8):
                for ci in range(8):
                    A[ki, ci * F + 2 * f1 + kj, co * F1 + f1] = w1[co, ci, ki, kj]
    b1v = np.repeat(b1, F1)[None, :]

    # conv2 (depthwise) folded with conv3 (pointwise), exact: C[ki]: (8*F1) -> (8*F2)
    C = np.zeros((3, 8 * F1, 8 * F2), np.float32)
    f2 = np.arange(F2)
    for ki in range(3):
        for kj in range(3):
            for c1 in range(8):
                for c2 in range(8):
                    C[ki, c1 * F1 + 2 * f2 + kj, c2 * F2 + f2] = \
                        w3[c2, c1] * w2[c1, 0, ki, kj]
    b23 = w3 @ b2 + b3
    b23v = np.repeat(b23, F2)[None, :]

    # frequency Linear as a level-block-diagonal (8*F2) -> (8*D) matrix
    Wout = np.zeros((8 * F2, 8 * D), np.float32)
    for c in range(8):
        Wout[c * F2:(c + 1) * F2, c * D:(c + 1) * D] = wout
    boutv = np.tile(bout, 8)[None, :]

    # per-head attention weights, laid out so every kernel einsum is transpose-free
    wq_r = np.asarray(params["wq"], np.float32).reshape(D, H, dk).transpose(1, 0, 2)
    wk_r = np.asarray(params["wk"], np.float32).reshape(D, H, dk).transpose(1, 0, 2)
    wv_r = np.asarray(params["wv"], np.float32).reshape(D, H, dk).transpose(1, 0, 2)
    wo_r = np.asarray(params["wo"], np.float32).reshape(H, dk, D)
    bq_r = np.asarray(params["bq"], np.float32).reshape(H, 1, dk)
    bk_r = np.asarray(params["bk"], np.float32).reshape(H, 1, dk)
    bv_r = np.asarray(params["bv"], np.float32).reshape(H, 1, dk)
    bo_r = np.asarray(params["bo"], np.float32).reshape(1, D)

    cdt = COMPUTE_DTYPE
    jn = jnp.asarray
    return dict(
        odim=D, geom=geom,
        A0=jn(A[0], cdt), A1=jn(A[1], cdt), A2=jn(A[2], cdt), b1v=jn(b1v),
        C0=jn(C[0], cdt), C1=jn(C[1], cdt), C2=jn(C[2], cdt), b23v=jn(b23v),
        Wout=jn(Wout, cdt), boutv=jn(boutv),
        wq_r=jn(wq_r, cdt), wk_r=jn(wk_r, cdt), wv_r=jn(wv_r, cdt),
        wo_r=jn(wo_r), bq_r=jn(bq_r), bk_r=jn(bk_r), bv_r=jn(bv_r), bo_r=jn(bo_r),
        reg=jn(np.asarray(params["reg"], np.float32)),
        pe=jn(_sinusoidal_pe(T2cov, D)),        # precomputed once, passed as input
    )


# ----------------------------- forward ----------------------------------------

def conv2d_subsampling_ts_att_register(fp, x, x_mask, spk_emb, spk_mask):
    B, C, T, F = x.shape
    assert C == 8, "module expects 8 input channels"
    D = fp["odim"]
    _, T2, _, _, T2cov = fp["geom"]

    # --- fused conv1 -> folded conv2/conv3 -> frequency Linear ------------------
    qflat = _fused_conv_subsample(fp, x)                               # (B,T2cov,8D)
    qlv = jnp.transpose(qflat.reshape(B, T2cov, 8, D), (0, 2, 1, 3))   # (B,8,T2cov,D)
    qlv = qlv.astype(COMPUTE_DTYPE)

    # --- mask subsampling: x_mask[:, :, :-2:2][:, :, :-2:2] ---------------------
    m = x_mask[:, :, :-2:2][:, :, :-2:2]                               # (B, 1, T2)

    # --- ts_att additive bias: (x_mask.T & spk_mask), register col always on ----
    att = jnp.logical_and(jnp.transpose(m, (0, 2, 1)), spk_mask)       # (B, T2, S)
    att = jnp.pad(att, ((0, 0), (0, T2cov - T2), (0, 0)))              # pad time
    att = jnp.concatenate([jnp.ones((B, T2cov, 1), dtype=bool), att], axis=2)
    bias = jnp.where(att, 0.0, -1e30).astype(jnp.float32)              # (B,T2cov,S+1)

    reg = jnp.broadcast_to(fp["reg"].reshape(1, 1, D), (B, 1, D))
    kv = jnp.concatenate([reg, spk_emb], axis=1).astype(COMPUTE_DTYPE)  # (B,S+1,D)

    y = _pallas_ts_att_posenc(fp, qlv, kv, bias, fp["pe"])             # (B,T2cov,D)
    return y[:, :T2], m


# ----------------------------- main --------------------------------------------

if __name__ == "__main__":
    B, C, T, idim, odim, S = 2, 8, 32, 16, 32, 4
    key = jax.random.PRNGKey(0)
    kx, kspk, kp = jax.random.split(key, 3)

    x = jax.random.normal(kx, (B, C, T, idim), jnp.float32)
    spk_emb = jax.random.normal(kspk, (B, S, odim), jnp.float32)
    x_mask = jnp.ones((B, 1, T), dtype=bool).at[1, 0, 24:].set(False)
    spk_mask = jnp.ones((B, 1, S), dtype=bool).at[0, 0, S - 1:].set(False)

    params = init_params(kp, idim, odim)
    fp = fold_params(params, idim, odim, T)

    y, y_mask = conv2d_subsampling_ts_att_register(fp, x, x_mask, spk_emb, spk_mask)
    jax.block_until_ready(y)
    jax.block_until_ready(y_mask)
    assert y.shape == (B, 7, odim) and y_mask.shape == (B, 1, 7)
    assert bool(jnp.all(jnp.isfinite(y)))
    print("KERNEL_OK")
</pallas_src>

<mosaic_0001>
module attributes {stable_mosaic.version = 11 : i64} {
  func.func @_fused_conv_kernel(%arg0: i32, %arg1: i32, %arg2: memref<1x1x9x128xbf16, #tpu.memory_space<vmem>>, %arg3: memref<1x1x9x128xbf16, #tpu.memory_space<vmem>>, %arg4: memref<1x1x9x128xbf16, #tpu.memory_space<vmem>>, %arg5: memref<1x1x9x128xbf16, #tpu.memory_space<vmem>>, %arg6: memref<128x56xbf16, #tpu.memory_space<vmem>>, %arg7: memref<128x56xbf16, #tpu.memory_space<vmem>>, %arg8: memref<128x56xbf16, #tpu.memory_space<vmem>>, %arg9: memref<1x56xf32, #tpu.memory_space<vmem>>, %arg10: memref<56x24xbf16, #tpu.memory_space<vmem>>, %arg11: memref<56x24xbf16, #tpu.memory_space<vmem>>, %arg12: memref<56x24xbf16, #tpu.memory_space<vmem>>, %arg13: memref<1x24xf32, #tpu.memory_space<vmem>>, %arg14: memref<24x256xbf16, #tpu.memory_space<vmem>>, %arg15: memref<1x256xf32, #tpu.memory_space<vmem>>, %arg16: memref<1x8x256xf32, #tpu.memory_space<vmem>>) attributes {dimension_semantics = [#tpu.dimension_semantics<parallel>, #tpu.dimension_semantics<parallel>], iteration_bounds = array<i64: 2, 1>, scalar_prefetch = 0 : i64, scratch_operands = 0 : i64, tpu.core_type = #tpu.core_type<tc>, window_params = [{transform_indices = @transform_0, window_bounds = array<i64: 1, 1, 9, 128>}, {transform_indices = @transform_1, window_bounds = array<i64: 1, 1, 9, 128>}, {transform_indices = @transform_2, window_bounds = array<i64: 1, 1, 9, 128>}, {transform_indices = @transform_3, window_bounds = array<i64: 1, 1, 9, 128>}, {pipeline_mode = #tpu.pipeline_mode<synchronous>, transform_indices = @transform_4, window_bounds = array<i64: 128, 56>}, {pipeline_mode = #tpu.pipeline_mode<synchronous>, transform_indices = @transform_5, window_bounds = array<i64: 128, 56>}, {pipeline_mode = #tpu.pipeline_mode<synchronous>, transform_indices = @transform_6, window_bounds = array<i64: 128, 56>}, {pipeline_mode = #tpu.pipeline_mode<synchronous>, transform_indices = @transform_7, window_bounds = array<i64: 1, 56>}, {pipeline_mode = #tpu.pipeline_mode<synchronous>, transform_indices = @transform_8, window_bounds = array<i64: 56, 24>}, {pipeline_mode = #tpu.pipeline_mode<synchronous>, transform_indices = @transform_9, window_bounds = array<i64: 56, 24>}, {pipeline_mode = #tpu.pipeline_mode<synchronous>, transform_indices = @transform_10, window_bounds = array<i64: 56, 24>}, {pipeline_mode = #tpu.pipeline_mode<synchronous>, transform_indices = @transform_11, window_bounds = array<i64: 1, 24>}, {pipeline_mode = #tpu.pipeline_mode<synchronous>, transform_indices = @transform_12, window_bounds = array<i64: 24, 256>}, {pipeline_mode = #tpu.pipeline_mode<synchronous>, transform_indices = @transform_13, window_bounds = array<i64: 1, 256>}, {transform_indices = @transform_14, window_bounds = array<i64: 1, 8, 256>}]} {
    %c0 = arith.constant 0 : index
    %c0_0 = arith.constant 0 : index
    %c0_1 = arith.constant 0 : index
    %c0_2 = arith.constant 0 : index
    %0 = vector.load %arg2[%c0, %c0_0, %c0_1, %c0_2] : memref<1x1x9x128xbf16, #tpu.memory_space<vmem>>, vector<1x1x9x128xbf16>
    %1 = vector.shape_cast %0 : vector<1x1x9x128xbf16> to vector<9x128xbf16>
    %c0_3 = arith.constant 0 : index
    %c0_4 = arith.constant 0 : index
    %c0_5 = arith.constant 0 : index
    %c0_6 = arith.constant 0 : index
    %2 = vector.load %arg3[%c0_3, %c0_4, %c0_5, %c0_6] : memref<1x1x9x128xbf16, #tpu.memory_space<vmem>>, vector<1x1x9x128xbf16>
    %3 = vector.shape_cast %2 : vector<1x1x9x128xbf16> to vector<9x128xbf16>
    %c0_7 = arith.constant 0 : index
    %c0_8 = arith.constant 0 : index
    %c0_9 = arith.constant 0 : index
    %c0_10 = arith.constant 0 : index
    %4 = vector.load %arg4[%c0_7, %c0_8, %c0_9, %c0_10] : memref<1x1x9x128xbf16, #tpu.memory_space<vmem>>, vector<1x1x9x128xbf16>
    %5 = vector.shape_cast %4 : vector<1x1x9x128xbf16> to vector<9x128xbf16>
    %c0_11 = arith.constant 0 : index
    %c0_12 = arith.constant 0 : index
    %c0_13 = arith.constant 0 : index
    %c0_14 = arith.constant 0 : index
    %6 = vector.load %arg5[%c0_11, %c0_12, %c0_13, %c0_14] : memref<1x1x9x128xbf16, #tpu.memory_space<vmem>>, vector<1x1x9x128xbf16>
    %7 = vector.shape_cast %6 : vector<1x1x9x128xbf16> to vector<9x128xbf16>
    %c0_15 = arith.constant 0 : index
    %c0_16 = arith.constant 0 : index
    %8 = vector.load %arg6[%c0_15, %c0_16] : memref<128x56xbf16, #tpu.memory_space<vmem>>, vector<128x56xbf16>
    %cst = arith.constant dense<0.000000e+00> : vector<9x56xf32>
    %9 = tpu.matmul %1, %8, %cst {dimension_numbers = #tpu.dot_dimension_numbers<[1], [0], [0], [1], [0, 0, 1, 1], [], []>} : vector<9x128xbf16>, vector<128x56xbf16>, vector<9x56xf32> -> vector<9x56xf32>
    %c0_17 = arith.constant 0 : index
    %c0_18 = arith.constant 0 : index
    %10 = vector.load %arg7[%c0_17, %c0_18] : memref<128x56xbf16, #tpu.memory_space<vmem>>, vector<128x56xbf16>
    %cst_19 = arith.constant dense<0.000000e+00> : vector<9x56xf32>
    %11 = tpu.matmul %3, %10, %cst_19 {dimension_numbers = #tpu.dot_dimension_numbers<[1], [0], [0], [1], [0, 0, 1, 1], [], []>} : vector<9x128xbf16>, vector<128x56xbf16>, vector<9x56xf32> -> vector<9x56xf32>
    %12 = arith.addf %9, %11 : vector<9x56xf32>
    %c0_20 = arith.constant 0 : index
    %c0_21 = arith.constant 0 : index
    %13 = vector.load %arg8[%c0_20, %c0_21] : memref<128x56xbf16, #tpu.memory_space<vmem>>, vector<128x56xbf16>
    %cst_22 = arith.constant dense<0.000000e+00> : vector<9x56xf32>
    %14 = tpu.matmul %5, %13, %cst_22 {dimension_numbers = #tpu.dot_dimension_numbers<[1], [0], [0], [1], [0, 0, 1, 1], [], []>} : vector<9x128xbf16>, vector<128x56xbf16>, vector<9x56xf32> -> vector<9x56xf32>
    %15 = arith.addf %12, %14 : vector<9x56xf32>
    %c0_23 = arith.constant 0 : index
    %c0_24 = arith.constant 0 : index
    %16 = vector.load %arg9[%c0_23, %c0_24] : memref<1x56xf32, #tpu.memory_space<vmem>>, vector<1x56xf32>
    %17 = vector.broadcast %16 : vector<1x56xf32> to vector<9x56xf32>
    %18 = arith.addf %15, %17 : vector<9x56xf32>
    %cst_25 = arith.constant 0.000000e+00 : f32
    %19 = vector.broadcast %cst_25 : f32 to vector<9x56xf32>
    %20 = arith.maximumf %18, %19 : vector<9x56xf32>
    %21 = vector.extract_strided_slice %5 {offsets = [0, 0], sizes = [8, 128], strides = [1, 1]} : vector<9x128xbf16> to vector<8x128xbf16>
    %c0_26 = arith.constant 0 : index
    %c0_27 = arith.constant 0 : index
    %22 = vector.load %arg6[%c0_26, %c0_27] : memref<128x56xbf16, #tpu.memory_space<vmem>>, vector<128x56xbf16>
    %cst_28 = arith.constant dense<0.000000e+00> : vector<8x56xf32>
    %23 = tpu.matmul %21, %22, %cst_28 {dimension_numbers = #tpu.dot_dimension_numbers<[1], [0], [0], [1], [0, 0, 1, 1], [], []>} : vector<8x128xbf16>, vector<128x56xbf16>, vector<8x56xf32> -> vector<8x56xf32>
    %24 = vector.extract_strided_slice %7 {offsets = [0, 0], sizes = [8, 128], strides = [1, 1]} : vector<9x128xbf16> to vector<8x128xbf16>
    %c0_29 = arith.constant 0 : index
    %c0_30 = arith.constant 0 : index
    %25 = vector.load %arg7[%c0_29, %c0_30] : memref<128x56xbf16, #tpu.memory_space<vmem>>, vector<128x56xbf16>
    %cst_31 = arith.constant dense<0.000000e+00> : vector<8x56xf32>
    %26 = tpu.matmul %24, %25, %cst_31 {dimension_numbers = #tpu.dot_dimension_numbers<[1], [0], [0], [1], [0, 0, 1, 1], [], []>} : vector<8x128xbf16>, vector<128x56xbf16>, vector<8x56xf32> -> vector<8x56xf32>
    %27 = arith.addf %23, %26 : vector<8x56xf32>
    %28 = vector.extract_strided_slice %1 {offsets = [1, 0], sizes = [8, 128], strides = [1, 1]} : vector<9x128xbf16> to vector<8x128xbf16>
    %c0_32 = arith.constant 0 : index
    %c0_33 = arith.constant 0 : index
    %29 = vector.load %arg8[%c0_32, %c0_33] : memref<128x56xbf16, #tpu.memory_space<vmem>>, vector<128x56xbf16>
    %cst_34 = arith.constant dense<0.000000e+00> : vector<8x56xf32>
    %30 = tpu.matmul %28, %29, %cst_34 {dimension_numbers = #tpu.dot_dimension_numbers<[1], [0], [0], [1], [0, 0, 1, 1], [], []>} : vector<8x128xbf16>, vector<128x56xbf16>, vector<8x56xf32> -> vector<8x56xf32>
    %31 = arith.addf %27, %30 : vector<8x56xf32>
    %c0_35 = arith.constant 0 : index
    %c0_36 = arith.constant 0 : index
    %32 = vector.load %arg9[%c0_35, %c0_36] : memref<1x56xf32, #tpu.memory_space<vmem>>, vector<1x56xf32>
    %33 = vector.broadcast %32 : vector<1x56xf32> to vector<8x56xf32>
    %34 = arith.addf %31, %33 : vector<8x56xf32>
    %cst_37 = arith.constant 0.000000e+00 : f32
    %35 = vector.broadcast %cst_37 : f32 to vector<8x56xf32>
    %36 = arith.maximumf %34, %35 : vector<8x56xf32>
    %37 = arith.truncf %20 : vector<9x56xf32> to vector<9x56xbf16>
    %38 = arith.truncf %36 : vector<8x56xf32> to vector<8x56xbf16>
    %39 = vector.extract_strided_slice %37 {offsets = [0, 0], sizes = [8, 56], strides = [1, 1]} : vector<9x56xbf16> to vector<8x56xbf16>
    %c0_38 = arith.constant 0 : index
    %c0_39 = arith.constant 0 : index
    %40 = vector.load %arg10[%c0_38, %c0_39] : memref<56x24xbf16, #tpu.memory_space<vmem>>, vector<56x24xbf16>
    %cst_40 = arith.constant dense<0.000000e+00> : vector<8x24xf32>
    %41 = tpu.matmul %39, %40, %cst_40 {dimension_numbers = #tpu.dot_dimension_numbers<[1], [0], [0], [1], [0, 0, 1, 1], [], []>} : vector<8x56xbf16>, vector<56x24xbf16>, vector<8x24xf32> -> vector<8x24xf32>
    %c0_41 = arith.constant 0 : index
    %c0_42 = arith.constant 0 : index
    %42 = vector.load %arg11[%c0_41, %c0_42] : memref<56x24xbf16, #tpu.memory_space<vmem>>, vector<56x24xbf16>
    %cst_43 = arith.constant dense<0.000000e+00> : vector<8x24xf32>
    %43 = tpu.matmul %38, %42, %cst_43 {dimension_numbers = #tpu.dot_dimension_numbers<[1], [0], [0], [1], [0, 0, 1, 1], [], []>} : vector<8x56xbf16>, vector<56x24xbf16>, vector<8x24xf32> -> vector<8x24xf32>
    %44 = arith.addf %41, %43 : vector<8x24xf32>
    %45 = vector.extract_strided_slice %37 {offsets = [1, 0], sizes = [8, 56], strides = [1, 1]} : vector<9x56xbf16> to vector<8x56xbf16>
    %c0_44 = arith.constant 0 : index
    %c0_45 = arith.constant 0 : index
    %46 = vector.load %arg12[%c0_44, %c0_45] : memref<56x24xbf16, #tpu.memory_space<vmem>>, vector<56x24xbf16>
    %cst_46 = arith.constant dense<0.000000e+00> : vector<8x24xf32>
    %47 = tpu.matmul %45, %46, %cst_46 {dimension_numbers = #tpu.dot_dimension_numbers<[1], [0], [0], [1], [0, 0, 1, 1], [], []>} : vector<8x56xbf16>, vector<56x24xbf16>, vector<8x24xf32> -> vector<8x24xf32>
    %48 = arith.addf %44, %47 : vector<8x24xf32>
    %c0_47 = arith.constant 0 : index
    %c0_48 = arith.constant 0 : index
    %49 = vector.load %arg13[%c0_47, %c0_48] : memref<1x24xf32, #tpu.memory_space<vmem>>, vector<1x24xf32>
    %50 = vector.broadcast %49 : vector<1x24xf32> to vector<8x24xf32>
    %51 = arith.addf %48, %50 : vector<8x24xf32>
    %cst_49 = arith.constant 0.000000e+00 : f32
    %52 = vector.broadcast %cst_49 : f32 to vector<8x24xf32>
    %53 = arith.maximumf %51, %52 : vector<8x24xf32>
    %54 = arith.truncf %53 : vector<8x24xf32> to vector<8x24xbf16>
    %c0_50 = arith.constant 0 : index
    %c0_51 = arith.constant 0 : index
    %55 = vector.load %arg14[%c0_50, %c0_51] : memref<24x256xbf16, #tpu.memory_space<vmem>>, vector<24x256xbf16>
    %cst_52 = arith.constant dense<0.000000e+00> : vector<8x256xf32>
    %56 = tpu.matmul %54, %55, %cst_52 {dimension_numbers = #tpu.dot_dimension_numbers<[1], [0], [0], [1], [0, 0, 1, 1], [], []>} : vector<8x24xbf16>, vector<24x256xbf16>, vector<8x256xf32> -> vector<8x256xf32>
    %c0_53 = arith.constant 0 : index
    %c0_54 = arith.constant 0 : index
    %57 = vector.load %arg15[%c0_53, %c0_54] : memref<1x256xf32, #tpu.memory_space<vmem>>, vector<1x256xf32>
    %58 = vector.broadcast %57 : vector<1x256xf32> to vector<8x256xf32>
    %59 = arith.addf %56, %58 : vector<8x256xf32>
    %c0_55 = arith.constant 0 : index
    %c0_56 = arith.constant 0 : index
    %c0_57 = arith.constant 0 : index
    %60 = vector.load %arg16[%c0_55, %c0_56, %c0_57] : memref<1x8x256xf32, #tpu.memory_space<vmem>>, vector<1x8x256xf32>
    %61 = vector.shape_cast %60 : vector<1x8x256xf32> to vector<8x256xf32>
    %62 = vector.shape_cast %59 : vector<8x256xf32> to vector<1x8x256xf32>
    tpu.vector_store %arg16[%c0_55, %c0_56, %c0_57], %62 {strides = array<i32>} : memref<1x8x256xf32, #tpu.memory_space<vmem>>, vector<1x8x256xf32>,
    return
  }
  func.func @transform_0(%arg0: i32, %arg1: i32) -> (i32, i32, i32, i32) {
    %c0_i32 = arith.constant 0 : i32
    %c0_i32_0 = arith.constant 0 : i32
    %c0_i32_1 = arith.constant 0 : i32
    return %arg0, %arg1, %c0_i32, %c0_i32_0 : i32, i32, i32, i32
  }
  func.func @transform_1(%arg0: i32, %arg1: i32) -> (i32, i32, i32, i32) {
    %c0_i32 = arith.constant 0 : i32
    %c0_i32_0 = arith.constant 0 : i32
    %c0_i32_1 = arith.constant 0 : i32
    return %arg0, %arg1, %c0_i32, %c0_i32_0 : i32, i32, i32, i32
  }
  func.func @transform_2(%arg0: i32, %arg1: i32) -> (i32, i32, i32, i32) {
    %c0_i32 = arith.constant 0 : i32
    %c0_i32_0 = arith.constant 0 : i32
    %c0_i32_1 = arith.constant 0 : i32
    return %arg0, %arg1, %c0_i32, %c0_i32_0 : i32, i32, i32, i32
  }
  func.func @transform_3(%arg0: i32, %arg1: i32) -> (i32, i32, i32, i32) {
    %c0_i32 = arith.constant 0 : i32
    %c0_i32_0 = arith.constant 0 : i32
    %c0_i32_1 = arith.constant 0 : i32
    return %arg0, %arg1, %c0_i32, %c0_i32_0 : i32, i32, i32, i32
  }
  func.func @transform_4(%arg0: i32, %arg1: i32) -> (i32, i32) {
    %c0_i32 = arith.constant 0 : i32
    %c0_i32_0 = arith.constant 0 : i32
    %c0_i32_1 = arith.constant 0 : i32
    return %c0_i32, %c0_i32_0 : i32, i32
  }
  func.func @transform_5(%arg0: i32, %arg1: i32) -> (i32, i32) {
    %c0_i32 = arith.constant 0 : i32
    %c0_i32_0 = arith.constant 0 : i32
    %c0_i32_1 = arith.constant 0 : i32
    return %c0_i32, %c0_i32_0 : i32, i32
  }
  func.func @transform_6(%arg0: i32, %arg1: i32) -> (i32, i32) {
    %c0_i32 = arith.constant 0 : i32
    %c0_i32_0 = arith.constant 0 : i32
    %c0_i32_1 = arith.constant 0 : i32
    return %c0_i32, %c0_i32_0 : i32, i32
  }
  func.func @transform_7(%arg0: i32, %arg1: i32) -> (i32, i32) {
    %c0_i32 = arith.constant 0 : i32
    %c0_i32_0 = arith.constant 0 : i32
    %c0_i32_1 = arith.constant 0 : i32
    return %c0_i32, %c0_i32_0 : i32, i32
  }
  func.func @transform_8(%arg0: i32, %arg1: i32) -> (i32, i32) {
    %c0_i32 = arith.constant 0 : i32
    %c0_i32_0 = arith.constant 0 : i32
    %c0_i32_1 = arith.constant 0 : i32
    return %c0_i32, %c0_i32_0 : i32, i32
  }
  func.func @transform_9(%arg0: i32, %arg1: i32) -> (i32, i32) {
    %c0_i32 = arith.constant 0 : i32
    %c0_i32_0 = arith.constant 0 : i32
    %c0_i32_1 = arith.constant 0 : i32
    return %c0_i32, %c0_i32_0 : i32, i32
  }
  func.func @transform_10(%arg0: i32, %arg1: i32) -> (i32, i32) {
    %c0_i32 = arith.constant 0 : i32
    %c0_i32_0 = arith.constant 0 : i32
    %c0_i32_1 = arith.constant 0 : i32
    return %c0_i32, %c0_i32_0 : i32, i32
  }
  func.func @transform_11(%arg0: i32, %arg1: i32) -> (i32, i32) {
    %c0_i32 = arith.constant 0 : i32
    %c0_i32_0 = arith.constant 0 : i32
    %c0_i32_1 = arith.constant 0 : i32
    return %c0_i32, %c0_i32_0 : i32, i32
  }
  func.func @transform_12(%arg0: i32, %arg1: i32) -> (i32, i32) {
    %c0_i32 = arith.constant 0 : i32
    %c0_i32_0 = arith.constant 0 : i32
    %c0_i32_1 = arith.constant 0 : i32
    return %c0_i32, %c0_i32_0 : i32, i32
  }
  func.func @transform_13(%arg0: i32, %arg1: i32) -> (i32, i32) {
    %c0_i32 = arith.constant 0 : i32
    %c0_i32_0 = arith.constant 0 : i32
    %c0_i32_1 = arith.constant 0 : i32
    return %c0_i32, %c0_i32_0 : i32, i32
  }
  func.func @transform_14(%arg0: i32, %arg1: i32) -> (i32, i32, i32) {
    %c0_i32 = arith.constant 0 : i32
    %c0_i32_0 = arith.constant 0 : i32
    return %arg0, %arg1, %c0_i32 : i32, i32, i32
  }
}

</mosaic_0001>

<llo_original>
// kernel: tpu_custom_call.1
$region0: #{tpu_custom_call.1}
  #allocation0 [shape = 'u32[]', space=smem, size = 0x4, offset = 0x4, fixed_abs, tag = 'smem constant byte address 0x4 - core index']
  #allocation1 [shape = 'u32[144,128]{1,0:T(1,128)}', space=vmem, size = 0x12000, scoped, tag = 'internal scratch']
  %s0 = inlined_call_operand.vmem [shape: bf16[2,1,9,128], index: 0, kind: input, shape index: {}]
  %s1 = inlined_call_operand.vmem [shape: bf16[2,1,9,128], index: 1, kind: input, shape index: {}]
  %s2 = inlined_call_operand.vmem [shape: bf16[2,1,9,128], index: 2, kind: input, shape index: {}]
  %s3 = inlined_call_operand.vmem [shape: bf16[2,1,9,128], index: 3, kind: input, shape index: {}]
  %s4 = inlined_call_operand.vmem [shape: bf16[128,56], index: 4, kind: input, shape index: {}]
  %s5 = inlined_call_operand.vmem [shape: bf16[128,56], index: 5, kind: input, shape index: {}]
  %s6 = inlined_call_operand.vmem [shape: bf16[128,56], index: 6, kind: input, shape index: {}]
  %s7 = inlined_call_operand.vmem [shape: f32[1,56], index: 7, kind: input, shape index: {}]
  %s8 = inlined_call_operand.vmem [shape: bf16[56,24], index: 8, kind: input, shape index: {}]
  %s9 = inlined_call_operand.vmem [shape: bf16[56,24], index: 9, kind: input, shape index: {}]
  %s10 = inlined_call_operand.vmem [shape: bf16[56,24], index: 10, kind: input, shape index: {}]
  %s11 = inlined_call_operand.vmem [shape: f32[1,24], index: 11, kind: input, shape index: {}]
  %s12 = inlined_call_operand.vmem [shape: bf16[24,256], index: 12, kind: input, shape index: {}]
  %s13 = inlined_call_operand.vmem [shape: f32[1,256], index: 13, kind: input, shape index: {}]
  %s14 = inlined_call_operand.hbm [shape: f32[2,8,256], index: 14, kind: output, shape index: {}]
  %s15 = sld [smem:[#allocation0]]
  $region89: #{tpu_custom_call.1} parent=0
    _
  %s17 = ssub.s32 1, %s15
  %s18 = scalar_select 0, %s17, %s15
  $region1: #{tpu_custom_call.1} parent=0
    #allocation2 [shape = 'u8[16384]{0}', space=vmem, size = 0x4000, scoped, tag = 'output window, operand 0']
    #allocation3 [shape = 's32[2]{0}', space=sflag, size = 0x8, scoped, tag = 'scoped memory for tpu_custom_call.1']
    %19 = vsyncpa [#allocation3], 0
    %s20 = scalar_lea.sflag [#allocation3], 1
    %21 = vsyncpa %s20, 0
    loop: start=0, step=1, limit=4
    $region2: #{tpu_custom_call.1} parent=1 // loop_pre_header
      _
    $region3: #{tpu_custom_call.1} parent=1 // loop_header
      %s23 = sphi 0, %s27
      %p24 = scmp.ge.s32.totalorder %s23, 4
      %s30 = sphi 0, %s42
      %s31 = sphi 0, %s38
      %s32 = sphi 0, %s30
      %s33 = sphi 0, %s31
      %s34 = sphi 0, %s32
      %s35 = sphi 0, %s33
      %s47 = sphi 0, %s49
      %s50 = sphi 0, %s47
      %s51 = sphi 0, %s50
      %s67 = sphi 0, %s51
      %s75 = sphi 0, %s77
      %s78 = sphi 0, %s75
      %s79 = sphi 0, %s78
      %s95 = sphi 0, %s79
      %s103 = sphi 0, %s105
      %s106 = sphi 0, %s103
      %s107 = sphi 0, %s106
      %s123 = sphi 0, %s107
      %s131 = sphi 0, %s133
      %s134 = sphi 0, %s131
      %s135 = sphi 0, %s134
      %s151 = sphi 0, %s135
      %s155 = sphi 0, %s155
      %s157 = sphi 0, %s155
      %s158 = sphi 0, %s157
      %s172 = sphi 0, %s158
      %s176 = sphi 0, %s176
      %s178 = sphi 0, %s176
      %s179 = sphi 0, %s178
      %s193 = sphi 0, %s179
      %s197 = sphi 0, %s197
      %s199 = sphi 0, %s197
      %s200 = sphi 0, %s199
      %s214 = sphi 0, %s200
      %s218 = sphi 0, %s218
      %s220 = sphi 0, %s218
      %s221 = sphi 0, %s220
      %s235 = sphi 0, %s221
      %s239 = sphi 0, %s239
      %s241 = sphi 0, %s239
      %s242 = sphi 0, %s241
      %s256 = sphi 0, %s242
      %s260 = sphi 0, %s260
      %s262 = sphi 0, %s260
      %s263 = sphi 0, %s262
      %s277 = sphi 0, %s263
      %s281 = sphi 0, %s281
      %s283 = sphi 0, %s281
      %s284 = sphi 0, %s283
      %s298 = sphi 0, %s284
      %s302 = sphi 0, %s302
      %s304 = sphi 0, %s302
      %s305 = sphi 0, %s304
      %s319 = sphi 0, %s305
      %s323 = sphi 0, %s323
      %s325 = sphi 0, %s323
      %s326 = sphi 0, %s325
      %s340 = sphi 0, %s326
      %s344 = sphi 0, %s344
      %s346 = sphi 0, %s344
      %s347 = sphi 0, %s346
      %s361 = sphi 0, %s347
      %s369 = sphi 0, %s371
      %s372 = sphi 0, %s369
      %s373 = sphi 0, %s372
      %s389 = sphi 0, %s373
    $region4: #{tpu_custom_call.1} parent=1 // loop_header_branch
      %26 = sbr.rel (%p24) target = $region8
    $region5: #{tpu_custom_call.1} parent=1 // loop_body
      %s28 = ssub.s32 %s23, 1
      %s29 = ssub.s32 %s23, 2
      %s36 = sadd.s32 1, %s31
      %p37 = scmp.ge.s32.totalorder %s36, 1
      %s38 = scalar_select %p37, 0, %s36
      %s39 = sadd.s32 1, %s30
      %s40 = scalar_select %p37, %s39, %s30
      %p41 = scmp.ge.s32.totalorder %s40, 2
      %s42 = scalar_select %p41, 0, %s40
      %s43 = ssub.s32 %s30, %s42
      %s44 = ssub.s32 %s31, %s38
      %s45 = sor.u32 %s43, %s44
      %p46 = scmp.eq.s32.totalorder %s45, 0
      %s48 = sadd.s32 %s47, 1
      %s49 = scalar_select %p46, %s47, %s48
      %p52 = pneg %p46
      %p53 = scmp.eq.s32.totalorder %s23, 1
      %p54 = por %p52, %p53
      %p55 = scmp.ne.s32.totalorder %s47, %s50
      %p56 = scmp.eq.s32.totalorder %s23, 0
      %p57 = por %p55, %p56
      %p58 = scmp.ne.s32.totalorder %s47, %s50
      %p59 = scmp.eq.s32.totalorder %s28, 1
      %p60 = por %p58, %p59
      %p61 = scmp.ne.s32.totalorder %s50, %s51
      %p62 = scmp.eq.s32.totalorder %s28, 0
      %p63 = por %p61, %p62
      %p64 = scmp.ne.s32.totalorder %s50, %s51
      %p65 = scmp.eq.s32.totalorder %s29, 1
      %p66 = por %p64, %p65
      %p68 = scmp.ne.s32.totalorder %s51, %s67
      %p69 = scmp.eq.s32.totalorder %s29, 0
      %p70 = por %p68, %p69
      %s71 = ssub.s32 %s30, %s42
      %s72 = ssub.s32 %s31, %s38
      %s73 = sor.u32 %s71, %s72
      %p74 = scmp.eq.s32.totalorder %s73, 0
      %s76 = sadd.s32 %s75, 1
      %s77 = scalar_select %p74, %s75, %s76
      %p80 = pneg %p74
      %p81 = scmp.eq.s32.totalorder %s23, 1
      %p82 = por %p80, %p81
      %p83 = scmp.ne.s32.totalorder %s75, %s78
      %p84 = scmp.eq.s32.totalorder %s23, 0
      %p85 = por %p83, %p84
      %p86 = scmp.ne.s32.totalorder %s75, %s78
      %p87 = scmp.eq.s32.totalorder %s28, 1
      %p88 = por %p86, %p87
      %p89 = scmp.ne.s32.totalorder %s78, %s79
      %p90 = scmp.eq.s32.totalorder %s28, 0
      %p91 = por %p89, %p90
      %p92 = scmp.ne.s32.totalorder %s78, %s79
      %p93 = scmp.eq.s32.totalorder %s29, 1
      %p94 = por %p92, %p93
      %p96 = scmp.ne.s32.totalorder %s79, %s95
      %p97 = scmp.eq.s32.totalorder %s29, 0
      %p98 = por %p96, %p97
      %s99 = ssub.s32 %s30, %s42
      %s100 = ssub.s32 %s31, %s38
      %s101 = sor.u32 %s99, %s100
      %p102 = scmp.eq.s32.totalorder %s101, 0
      %s104 = sadd.s32 %s103, 1
      %s105 = scalar_select %p102, %s103, %s104
      %p108 = pneg %p102
      %p109 = scmp.eq.s32.totalorder %s23, 1
      %p110 = por %p108, %p109
      %p111 = scmp.ne.s32.totalorder %s103, %s106
      %p112 = scmp.eq.s32.totalorder %s23, 0
      %p113 = por %p111, %p112
      %p114 = scmp.ne.s32.totalorder %s103, %s106
      %p115 = scmp.eq.s32.totalorder %s28, 1
      %p116 = por %p114, %p115
      %p117 = scmp.ne.s32.totalorder %s106, %s107
      %p118 = scmp.eq.s32.totalorder %s28, 0
      %p119 = por %p117, %p118
      %p120 = scmp.ne.s32.totalorder %s106, %s107
      %p121 = scmp.eq.s32.totalorder %s29, 1
      %p122 = por %p120, %p121
      %p124 = scmp.ne.s32.totalorder %s107, %s123
      %p125 = scmp.eq.s32.totalorder %s29, 0
      %p126 = por %p124, %p125
      %s127 = ssub.s32 %s30, %s42
      %s128 = ssub.s32 %s31, %s38
      %s129 = sor.u32 %s127, %s128
      %p130 = scmp.eq.s32.totalorder %s129, 0
      %s132 = sadd.s32 %s131, 1
      %s133 = scalar_select %p130, %s131, %s132
      %p136 = pneg %p130
      %p137 = scmp.eq.s32.totalorder %s23, 1
      %p138 = por %p136, %p137
      %p139 = scmp.ne.s32.totalorder %s131, %s134
      %p140 = scmp.eq.s32.totalorder %s23, 0
      %p141 = por %p139, %p140
      %p142 = scmp.ne.s32.totalorder %s131, %s134
      %p143 = scmp.eq.s32.totalorder %s28, 1
      %p144 = por %p142, %p143
      %p145 = scmp.ne.s32.totalorder %s134, %s135
      %p146 = scmp.eq.s32.totalorder %s28, 0
      %p147 = por %p145, %p146
      %p148 = scmp.ne.s32.totalorder %s134, %s135
      %p149 = scmp.eq.s32.totalorder %s29, 1
      %p150 = por %p148, %p149
      %p152 = scmp.ne.s32.totalorder %s135, %s151
      %p153 = scmp.eq.s32.totalorder %s29, 0
      %p154 = por %p152, %p153
      %s156 = sadd.s32 %s155, 1
      %p159 = scmp.eq.s32.totalorder %s23, 1
      %p160 = scmp.ne.s32.totalorder %s155, %s157
      %p161 = scmp.eq.s32.totalorder %s23, 0
      %p162 = por %p160, %p161
      %p163 = scmp.ne.s32.totalorder %s155, %s157
      %p164 = scmp.eq.s32.totalorder %s28, 1
      %p165 = por %p163, %p164
      %p166 = scmp.ne.s32.totalorder %s157, %s158
      %p167 = scmp.eq.s32.totalorder %s28, 0
      %p168 = por %p166, %p167
      %p169 = scmp.ne.s32.totalorder %s157, %s158
      %p170 = scmp.eq.s32.totalorder %s29, 1
      %p171 = por %p169, %p170
      %p173 = scmp.ne.s32.totalorder %s158, %s172
      %p174 = scmp.eq.s32.totalorder %s29, 0
      %p175 = por %p173, %p174
      %s177 = sadd.s32 %s176, 1
      %p180 = scmp.eq.s32.totalorder %s23, 1
      %p181 = scmp.ne.s32.totalorder %s176, %s178
      %p182 = scmp.eq.s32.totalorder %s23, 0
      %p183 = por %p181, %p182
      %p184 = scmp.ne.s32.totalorder %s176, %s178
      %p185 = scmp.eq.s32.totalorder %s28, 1
      %p186 = por %p184, %p185
      %p187 = scmp.ne.s32.totalorder %s178, %s179
      %p188 = scmp.eq.s32.totalorder %s28, 0
      %p189 = por %p187, %p188
      %p190 = scmp.ne.s32.totalorder %s178, %s179
      %p191 = scmp.eq.s32.totalorder %s29, 1
      %p192 = por %p190, %p191
      %p194 = scmp.ne.s32.totalorder %s179, %s193
      %p195 = scmp.eq.s32.totalorder %s29, 0
      %p196 = por %p194, %p195
      %s198 = sadd.s32 %s197, 1
      %p201 = scmp.eq.s32.totalorder %s23, 1
      %p202 = scmp.ne.s32.totalorder %s197, %s199
      %p203 = scmp.eq.s32.totalorder %s23, 0
      %p204 = por %p202, %p203
      %p205 = scmp.ne.s32.totalorder %s197, %s199
      %p206 = scmp.eq.s32.totalorder %s28, 1
      %p207 = por %p205, %p206
      %p208 = scmp.ne.s32.totalorder %s199, %s200
      %p209 = scmp.eq.s32.totalorder %s28, 0
      %p210 = por %p208, %p209
      %p211 = scmp.ne.s32.totalorder %s199, %s200
      %p212 = scmp.eq.s32.totalorder %s29, 1
      %p213 = por %p211, %p212
      %p215 = scmp.ne.s32.totalorder %s200, %s214
      %p216 = scmp.eq.s32.totalorder %s29, 0
      %p217 = por %p215, %p216
      %s219 = sadd.s32 %s218, 1
      %p222 = scmp.eq.s32.totalorder %s23, 1
      %p223 = scmp.ne.s32.totalorder %s218, %s220
      %p224 = scmp.eq.s32.totalorder %s23, 0
      %p225 = por %p223, %p224
      %p226 = scmp.ne.s32.totalorder %s218, %s220
      %p227 = scmp.eq.s32.totalorder %s28, 1
      %p228 = por %p226, %p227
      %p229 = scmp.ne.s32.totalorder %s220, %s221
      %p230 = scmp.eq.s32.totalorder %s28, 0
      %p231 = por %p229, %p230
      %p232 = scmp.ne.s32.totalorder %s220, %s221
      %p233 = scmp.eq.s32.totalorder %s29, 1
      %p234 = por %p232, %p233
      %p236 = scmp.ne.s32.totalorder %s221, %s235
      %p237 = scmp.eq.s32.totalorder %s29, 0
      %p238 = por %p236, %p237
      %s240 = sadd.s32 %s239, 1
      %p243 = scmp.eq.s32.totalorder %s23, 1
      %p244 = scmp.ne.s32.totalorder %s239, %s241
      %p245 = scmp.eq.s32.totalorder %s23, 0
      %p246 = por %p244, %p245
      %p247 = scmp.ne.s32.totalorder %s239, %s241
      %p248 = scmp.eq.s32.totalorder %s28, 1
      %p249 = por %p247, %p248
      %p250 = scmp.ne.s32.totalorder %s241, %s242
      %p251 = scmp.eq.s32.totalorder %s28, 0
      %p252 = por %p250, %p251
      %p253 = scmp.ne.s32.totalorder %s241, %s242
      %p254 = scmp.eq.s32.totalorder %s29, 1
      %p255 = por %p253, %p254
      %p257 = scmp.ne.s32.totalorder %s242, %s256
      %p258 = scmp.eq.s32.totalorder %s29, 0
      %p259 = por %p257, %p258
      %s261 = sadd.s32 %s260, 1
      %p264 = scmp.eq.s32.totalorder %s23, 1
      %p265 = scmp.ne.s32.totalorder %s260, %s262
      %p266 = scmp.eq.s32.totalorder %s23, 0
      %p267 = por %p265, %p266
      %p268 = scmp.ne.s32.totalorder %s260, %s262
      %p269 = scmp.eq.s32.totalorder %s28, 1
      %p270 = por %p268, %p269
      %p271 = scmp.ne.s32.totalorder %s262, %s263
      %p272 = scmp.eq.s32.totalorder %s28, 0
      %p273 = por %p271, %p272
      %p274 = scmp.ne.s32.totalorder %s262, %s263
      %p275 = scmp.eq.s32.totalorder %s29, 1
      %p276 = por %p274, %p275
      %p278 = scmp.ne.s32.totalorder %s263, %s277
      %p279 = scmp.eq.s32.totalorder %s29, 0
      %p280 = por %p278, %p279
      %s282 = sadd.s32 %s281, 1
      %p285 = scmp.eq.s32.totalorder %s23, 1
      %p286 = scmp.ne.s32.totalorder %s281, %s283
      %p287 = scmp.eq.s32.totalorder %s23, 0
      %p288 = por %p286, %p287
      %p289 = scmp.ne.s32.totalorder %s281, %s283
      %p290 = scmp.eq.s32.totalorder %s28, 1
      %p291 = por %p289, %p290
      %p292 = scmp.ne.s32.totalorder %s283, %s284
      %p293 = scmp.eq.s32.totalorder %s28, 0
      %p294 = por %p292, %p293
      %p295 = scmp.ne.s32.totalorder %s283, %s284
      %p296 = scmp.eq.s32.totalorder %s29, 1
      %p297 = por %p295, %p296
      %p299 = scmp.ne.s32.totalorder %s284, %s298
      %p300 = scmp.eq.s32.totalorder %s29, 0
      %p301 = por %p299, %p300
      %s303 = sadd.s32 %s302, 1
      %p306 = scmp.eq.s32.totalorder %s23, 1
      %p307 = scmp.ne.s32.totalorder %s302, %s304
      %p308 = scmp.eq.s32.totalorder %s23, 0
      %p309 = por %p307, %p308
      %p310 = scmp.ne.s32.totalorder %s302, %s304
      %p311 = scmp.eq.s32.totalorder %s28, 1
      %p312 = por %p310, %p311
      %p313 = scmp.ne.s32.totalorder %s304, %s305
      %p314 = scmp.eq.s32.totalorder %s28, 0
      %p315 = por %p313, %p314
      %p316 = scmp.ne.s32.totalorder %s304, %s305
      %p317 = scmp.eq.s32.totalorder %s29, 1
      %p318 = por %p316, %p317
      %p320 = scmp.ne.s32.totalorder %s305, %s319
      %p321 = scmp.eq.s32.totalorder %s29, 0
      %p322 = por %p320, %p321
      %s324 = sadd.s32 %s323, 1
      %p327 = scmp.eq.s32.totalorder %s23, 1
      %p328 = scmp.ne.s32.totalorder %s323, %s325
      %p329 = scmp.eq.s32.totalorder %s23, 0
      %p330 = por %p328, %p329
      %p331 = scmp.ne.s32.totalorder %s323, %s325
      %p332 = scmp.eq.s32.totalorder %s28, 1
      %p333 = por %p331, %p332
      %p334 = scmp.ne.s32.totalorder %s325, %s326
      %p335 = scmp.eq.s32.totalorder %s28, 0
      %p336 = por %p334, %p335
      %p337 = scmp.ne.s32.totalorder %s325, %s326
      %p338 = scmp.eq.s32.totalorder %s29, 1
      %p339 = por %p337, %p338
      %p341 = scmp.ne.s32.totalorder %s326, %s340
      %p342 = scmp.eq.s32.totalorder %s29, 0
      %p343 = por %p341, %p342
      %s345 = sadd.s32 %s344, 1
      %p348 = scmp.eq.s32.totalorder %s23, 1
      %p349 = scmp.ne.s32.totalorder %s344, %s346
      %p350 = scmp.eq.s32.totalorder %s23, 0
      %p351 = por %p349, %p350
      %p352 = scmp.ne.s32.totalorder %s344, %s346
      %p353 = scmp.eq.s32.totalorder %s28, 1
      %p354 = por %p352, %p353
      %p355 = scmp.ne.s32.totalorder %s346, %s347
      %p356 = scmp.eq.s32.totalorder %s28, 0
      %p357 = por %p355, %p356
      %p358 = scmp.ne.s32.totalorder %s346, %s347
      %p359 = scmp.eq.s32.totalorder %s29, 1
      %p360 = por %p358, %p359
      %p362 = scmp.ne.s32.totalorder %s347, %s361
      %p363 = scmp.eq.s32.totalorder %s29, 0
      %p364 = por %p362, %p363
      %s365 = ssub.s32 %s30, %s42
      %s366 = ssub.s32 %s31, %s38
      %s367 = sor.u32 %s365, %s366
      %p368 = scmp.eq.s32.totalorder %s367, 0
      %s370 = sadd.s32 %s369, 1
      %s371 = scalar_select %p368, %s369, %s370
      %p374 = pneg %p368
      %p375 = scmp.eq.s32.totalorder %s23, 1
      %p376 = por %p374, %p375
      %p377 = scmp.ne.s32.totalorder %s369, %s372
      %p378 = scmp.eq.s32.totalorder %s23, 0
      %p379 = por %p377, %p378
      %p380 = scmp.ne.s32.totalorder %s369, %s372
      %p381 = scmp.eq.s32.totalorder %s28, 1
      %p382 = por %p380, %p381
      %p383 = scmp.ne.s32.totalorder %s372, %s373
      %p384 = scmp.eq.s32.totalorder %s28, 0
      %p385 = por %p383, %p384
      %p386 = scmp.ne.s32.totalorder %s372, %s373
      %p387 = scmp.eq.s32.totalorder %s29, 1
      %p388 = por %p386, %p387
      %p390 = scmp.ne.s32.totalorder %s373, %s389
      %p391 = scmp.eq.s32.totalorder %s29, 0
      %p392 = por %p390, %p391
      %p393 = scmp.le.s32.totalorder 1, %s23
      %p394 = scmp.lt.s32.totalorder %s23, 3
      %p395 = pnand %p393, %p394
      %p396 = pneg %p395
      // Predicated region
      $region9: #{tpu_custom_call.1} parent=5 // pred_check
        _
      $region10: #{tpu_custom_call.1} parent=5 // pred_check_branch
        %398 = sbr.rel (%p395) target = $region12
      $region11: #{tpu_custom_call.1} parent=5 // pred_region
        %s399 = ssub.s32 %s23, 1
        // Predicated region
        $region13: #{tpu_custom_call.1} parent=11 // pred_check
          %p400 = pneg %p168
        $region14: #{tpu_custom_call.1} parent=11 // pred_check_branch
          %402 = sbr.rel (%p400) target = $region16
        $region15: #{tpu_custom_call.1} parent=11 // pred_region
          _
        $region16: #{tpu_custom_call.1} parent=11 // pred_fallthru
          _
        // Predicated region
        $region17: #{tpu_custom_call.1} parent=11 // pred_check
          %p403 = pneg %p189
        $region18: #{tpu_custom_call.1} parent=11 // pred_check_branch
          %405 = sbr.rel (%p403) target = $region20
        $region19: #{tpu_custom_call.1} parent=11 // pred_region
          _
        $region20: #{tpu_custom_call.1} parent=11 // pred_fallthru
          _
        // Predicated region
        $region21: #{tpu_custom_call.1} parent=11 // pred_check
          %p406 = pneg %p210
        $region22: #{tpu_custom_call.1} parent=11 // pred_check_branch
          %408 = sbr.rel (%p406) target = $region24
        $region23: #{tpu_custom_call.1} parent=11 // pred_region
          _
        $region24: #{tpu_custom_call.1} parent=11 // pred_fallthru
          _
        // Predicated region
        $region25: #{tpu_custom_call.1} parent=11 // pred_check
          %p409 = pneg %p231
        $region26: #{tpu_custom_call.1} parent=11 // pred_check_branch
          %411 = sbr.rel (%p409) target = $region28
        $region27: #{tpu_custom_call.1} parent=11 // pred_region
          _
        $region28: #{tpu_custom_call.1} parent=11 // pred_fallthru
          _
        // Predicated region
        $region29: #{tpu_custom_call.1} parent=11 // pred_check
          %p412 = pneg %p252
        $region30: #{tpu_custom_call.1} parent=11 // pred_check_branch
          %414 = sbr.rel (%p412) target = $region32
        $region31: #{tpu_custom_call.1} parent=11 // pred_region
          _
        $region32: #{tpu_custom_call.1} parent=11 // pred_fallthru
          _
        // Predicated region
        $region33: #{tpu_custom_call.1} parent=11 // pred_check
          %p415 = pneg %p273
        $region34: #{tpu_custom_call.1} parent=11 // pred_check_branch
          %417 = sbr.rel (%p415) target = $region36
        $region35: #{tpu_custom_call.1} parent=11 // pred_region
          _
        $region36: #{tpu_custom_call.1} parent=11 // pred_fallthru
          _
        // Predicated region
        $region37: #{tpu_custom_call.1} parent=11 // pred_check
          %p418 = pneg %p294
        $region38: #{tpu_custom_call.1} parent=11 // pred_check_branch
          %420 = sbr.rel (%p418) target = $region40
        $region39: #{tpu_custom_call.1} parent=11 // pred_region
          _
        $region40: #{tpu_custom_call.1} parent=11 // pred_fallthru
          _
        // Predicated region
        $region41: #{tpu_custom_call.1} parent=11 // pred_check
          %p421 = pneg %p315
        $region42: #{tpu_custom_call.1} parent=11 // pred_check_branch
          %423 = sbr.rel (%p421) target = $region44
        $region43: #{tpu_custom_call.1} parent=11 // pred_region
          _
        $region44: #{tpu_custom_call.1} parent=11 // pred_fallthru
          _
        // Predicated region
        $region45: #{tpu_custom_call.1} parent=11 // pred_check
          %p424 = pneg %p336
        $region46: #{tpu_custom_call.1} parent=11 // pred_check_branch
          %426 = sbr.rel (%p424) target = $region48
        $region47: #{tpu_custom_call.1} parent=11 // pred_region
          _
        $region48: #{tpu_custom_call.1} parent=11 // pred_fallthru
          _
        // Predicated region
        $region49: #{tpu_custom_call.1} parent=11 // pred_check
          %p427 = pneg %p357
        $region50: #{tpu_custom_call.1} parent=11 // pred_check_branch
          %429 = sbr.rel (%p427) target = $region52
        $region51: #{tpu_custom_call.1} parent=11 // pred_region
          _
        $region52: #{tpu_custom_call.1} parent=11 // pred_fallthru
          _
      $region12: #{tpu_custom_call.1} parent=5 // pred_fallthru
        _
      %p430 = scmp.lt.s32.totalorder %s23, 2
      // Predicated region
      $region53: #{tpu_custom_call.1} parent=5 // pred_check
        %p431 = pneg %p430
      $region54: #{tpu_custom_call.1} parent=5 // pred_check_branch
        %433 = sbr.rel (%p431) target = $region56
      $region55: #{tpu_custom_call.1} parent=5 // pred_region
        // Predicated region
        $region57: #{tpu_custom_call.1} parent=55 // pred_check
          %p434 = pneg %p57
        $region58: #{tpu_custom_call.1} parent=55 // pred_check_branch
          %436 = sbr.rel (%p434) target = $region60
        $region59: #{tpu_custom_call.1} parent=55 // pred_region
          %p437 = scmp.lt.s32.totalorder %s30, 1
          %s438 = scalar_select %p437, %s30, 1
          %p439 = scmp.lt.s32.totalorder %s31, 0
          %s440 = scalar_select %p439, %s31, 0
          %s441 = smul.addr %s440, 2
          %s442 = smul.addr %s438, 2
          %s443 = sadd.s32 %s441, %s442
          %s444 = smul.addr %s443, 4
          %s445 = scalar_lea.vmem %s0, %s444
        $region60: #{tpu_custom_call.1} parent=55 // pred_fallthru
          _
        // Predicated region
        $region61: #{tpu_custom_call.1} parent=55 // pred_check
          %p446 = pneg %p85
        $region62: #{tpu_custom_call.1} parent=55 // pred_check_branch
          %448 = sbr.rel (%p446) target = $region64
        $region63: #{tpu_custom_call.1} parent=55 // pred_region
          %p449 = scmp.lt.s32.totalorder %s30, 1
          %s450 = scalar_select %p449, %s30, 1
          %p451 = scmp.lt.s32.totalorder %s31, 0
          %s452 = scalar_select %p451, %s31, 0
          %s453 = smul.addr %s452, 2
          %s454 = smul.addr %s450, 2
          %s455 = sadd.s32 %s453, %s454
          %s456 = smul.addr %s455, 4
          %s457 = scalar_lea.vmem %s1, %s456
        $region64: #{tpu_custom_call.1} parent=55 // pred_fallthru
          _
        // Predicated region
        $region65: #{tpu_custom_call.1} parent=55 // pred_check
          %p458 = pneg %p113
        $region66: #{tpu_custom_call.1} parent=55 // pred_check_branch
          %460 = sbr.rel (%p458) target = $region68
        $region67: #{tpu_custom_call.1} parent=55 // pred_region
          %p461 = scmp.lt.s32.totalorder %s30, 1
          %s462 = scalar_select %p461, %s30, 1
          %p463 = scmp.lt.s32.totalorder %s31, 0
          %s464 = scalar_select %p463, %s31, 0
          %s465 = smul.addr %s464, 2
          %s466 = smul.addr %s462, 2
          %s467 = sadd.s32 %s465, %s466
          %s468 = smul.addr %s467, 4
          %s469 = scalar_lea.vmem %s2, %s468
        $region68: #{tpu_custom_call.1} parent=55 // pred_fallthru
          _
        // Predicated region
        $region69: #{tpu_custom_call.1} parent=55 // pred_check
          %p470 = pneg %p141
        $region70: #{tpu_custom_call.1} parent=55 // pred_check_branch
          %472 = sbr.rel (%p470) target = $region72
        $region71: #{tpu_custom_call.1} parent=55 // pred_region
          %p473 = scmp.lt.s32.totalorder %s30, 1
          %s474 = scalar_select %p473, %s30, 1
          %p475 = scmp.lt.s32.totalorder %s31, 0
          %s476 = scalar_select %p475, %s31, 0
          %s477 = smul.addr %s476, 2
          %s478 = smul.addr %s474, 2
          %s479 = sadd.s32 %s477, %s478
          %s480 = smul.addr %s479, 4
          %s481 = scalar_lea.vmem %s3, %s480
        $region72: #{tpu_custom_call.1} parent=55 // pred_fallthru
          _
      $region56: #{tpu_custom_call.1} parent=5 // pred_fallthru
        _
      %p482 = scmp.le.s32.totalorder 1, %s23
      %p483 = scmp.lt.s32.totalorder %s23, 3
      %p484 = pnand %p482, %p483
      %p485 = pneg %p484
      // Predicated region
      $region73: #{tpu_custom_call.1} parent=5 // pred_check
        _
      $region74: #{tpu_custom_call.1} parent=5 // pred_check_branch
        %487 = sbr.rel (%p484) target = $region76
      $region75: #{tpu_custom_call.1} parent=5 // pred_region
        %s488 = ssub.s32 %s23, 1
        %p489 = scmp.lt.s32.totalorder %s32, 1
        %s490 = scalar_select %p489, %s32, 1
        %p491 = scmp.lt.s32.totalorder %s33, 0
        %s492 = scalar_select %p491, %s33, 0
        %s493 = smul.addr %s492, 2
        %s494 = smul.addr %s490, 2
        %s495 = sadd.s32 %s493, %s494
        %s496 = smul.addr %s495, 4
        %s497 = scalar_lea.vmem %s0, %s496
        %p498 = pneg %p63
        %p499 = pneg %p60
        %p500 = scmp.lt.s32.totalorder %s32, 1
        %s501 = scalar_select %p500, %s32, 1
        %p502 = scmp.lt.s32.totalorder %s33, 0
        %s503 = scalar_select %p502, %s33, 0
        %s504 = smul.addr %s503, 2
        %s505 = smul.addr %s501, 2
        %s506 = sadd.s32 %s504, %s505
        %s507 = smul.addr %s506, 4
        %s508 = scalar_lea.vmem %s1, %s507
        %p509 = pneg %p91
        %p510 = pneg %p88
        %p511 = scmp.lt.s32.totalorder %s32, 1
        %s512 = scalar_select %p511, %s32, 1
        %p513 = scmp.lt.s32.totalorder %s33, 0
        %s514 = scalar_select %p513, %s33, 0
        %s515 = smul.addr %s514, 2
        %s516 = smul.addr %s512, 2
        %s517 = sadd.s32 %s515, %s516
        %s518 = smul.addr %s517, 4
        %s519 = scalar_lea.vmem %s2, %s518
        %p520 = pneg %p119
        %p521 = pneg %p116
        %p522 = scmp.lt.s32.totalorder %s32, 1
        %s523 = scalar_select %p522, %s32, 1
        %p524 = scmp.lt.s32.totalorder %s33, 0
        %s525 = scalar_select %p524, %s33, 0
        %s526 = smul.addr %s525, 2
        %s527 = smul.addr %s523, 2
        %s528 = sadd.s32 %s526, %s527
        %s529 = smul.addr %s528, 4
        %s530 = scalar_lea.vmem %s3, %s529
        %p531 = pneg %p147
        %p532 = pneg %p144
        %p533 = pneg %p168
        %p534 = pneg %p165
        %p535 = pneg %p189
        %p536 = pneg %p186
        %p537 = pneg %p210
        %p538 = pneg %p207
        %p539 = pneg %p231
        %p540 = pneg %p228
        %p541 = pneg %p252
        %p542 = pneg %p249
        %p543 = pneg %p273
        %p544 = pneg %p270
        %p545 = pneg %p294
        %p546 = pneg %p291
        %p547 = pneg %p315
        %p548 = pneg %p312
        %p549 = pneg %p336
        %p550 = pneg %p333
        %p551 = pneg %p357
        %p552 = pneg %p354
        %p553 = pneg %p385
        %p554 = pneg %p382
        %s555 = sand.u32 %s372, 1
        %s556 = scalar_lea.sflag [#allocation3], %s555
        %s557 = sand.u32 %s372, 1
        %s558 = smul.addr %s557, 16
        %s559 = scalar_lea.vmem [#allocation2], %s558
        %p560 = scmp.lt.s32.totalorder %s32, 1
        %s561 = scalar_select %p560, %s32, 1
        %p562 = scmp.lt.s32.totalorder %s33, 0
        %s563 = scalar_select %p562, %s33, 0
        %s564 = smul.addr %s563, 2
        %s565 = smul.addr %s561, 2
        %s566 = sadd.s32 %s564, %s565
        %s567 = smul.addr %s566, 4
        %s568 = scalar_lea.vmem %s0, %s567
        %p569 = scmp.lt.s32.totalorder %s32, 1
        %s570 = scalar_select %p569, %s32, 1
        %p571 = scmp.lt.s32.totalorder %s33, 0
        %s572 = scalar_select %p571, %s33, 0
        %s573 = smul.addr %s572, 2
        %s574 = smul.addr %s570, 2
        %s575 = sadd.s32 %s573, %s574
        %s576 = smul.addr %s575, 4
        %s577 = scalar_lea.vmem %s1, %s576
        %p578 = scmp.lt.s32.totalorder %s32, 1
        %s579 = scalar_select %p578, %s32, 1
        %p580 = scmp.lt.s32.totalorder %s33, 0
        %s581 = scalar_select %p580, %s33, 0
        %s582 = smul.addr %s581, 2
        %s583 = smul.addr %s579, 2
        %s584 = sadd.s32 %s582, %s583
        %s585 = smul.addr %s584, 4
        %s586 = scalar_lea.vmem %s2, %s585
        %p587 = scmp.lt.s32.totalorder %s32, 1
        %s588 = scalar_select %p587, %s32, 1
        %p589 = scmp.lt.s32.totalorder %s33, 0
        %s590 = scalar_select %p589, %s33, 0
        %s591 = smul.addr %s590, 2
        %s592 = smul.addr %s588, 2
        %s593 = sadd.s32 %s591, %s592
        %s594 = smul.addr %s593, 4
        %s595 = scalar_lea.vmem %s3, %s594
        %v597 = vld [vmem:[%s568] sm:$0xf]
        %v598 = vld [vmem:[%s568 + $0x4] sm:$0x1]
        %v599 = vld [vmem:[%s577] sm:$0xf]
        %v600 = vld [vmem:[%s577 + $0x4] sm:$0x1]
        %v601 = vld [vmem:[%s586] sm:$0xf]
        %v602 = vld [vmem:[%s586 + $0x4] sm:$0x1]
        %v603 = vld [vmem:[%s595] sm:$0xf]
        %v604 = vld [vmem:[%s4] sm:$0xf]
        %v605 = vld [vmem:[%s4 + $0x4] sm:$0xf]
        %v606 = vld [vmem:[%s4 + $0x8] sm:$0xf]
        %v607 = vld [vmem:[%s4 + $0xc] sm:$0xf]
        %v608 = vld [vmem:[%s4 + $0x10] sm:$0xf]
        %v609 = vld [vmem:[%s4 + $0x14] sm:$0xf]
        %v610 = vld [vmem:[%s4 + $0x18] sm:$0xf]
        %v611 = vld [vmem:[%s4 + $0x1c] sm:$0xf]
        %v612 = vld [vmem:[%s4 + $0x20] sm:$0xf]
        %v613 = vld [vmem:[%s4 + $0x24] sm:$0xf]
        %v614 = vld [vmem:[%s4 + $0x28] sm:$0xf]
        %v615 = vld [vmem:[%s4 + $0x2c] sm:$0xf]
        %v616 = vld [vmem:[%s4 + $0x30] sm:$0xf]
        %v617 = vld [vmem:[%s4 + $0x34] sm:$0xf]
        %v618 = vld [vmem:[%s4 + $0x38] sm:$0xf]
        %v619 = vld [vmem:[%s4 + $0x3c] sm:$0xf]
        %v620 = vld [vmem:[%s5] sm:$0xf]
        %v621 = vld [vmem:[%s5 + $0x4] sm:$0xf]
        %v622 = vld [vmem:[%s5 + $0x8] sm:$0xf]
        %v623 = vld [vmem:[%s5 + $0xc] sm:$0xf]
        %v624 = vld [vmem:[%s5 + $0x10] sm:$0xf]
        %v625 = vld [vmem:[%s5 + $0x14] sm:$0xf]
        %v626 = vld [vmem:[%s5 + $0x18] sm:$0xf]
        %v627 = vld [vmem:[%s5 + $0x1c] sm:$0xf]
        %v628 = vld [vmem:[%s5 + $0x20] sm:$0xf]
        %v629 = vld [vmem:[%s5 + $0x24] sm:$0xf]
        %v630 = vld [vmem:[%s5 + $0x28] sm:$0xf]
        %v631 = vld [vmem:[%s5 + $0x2c] sm:$0xf]
        %v632 = vld [vmem:[%s5 + $0x30] sm:$0xf]
        %v633 = vld [vmem:[%s5 + $0x34] sm:$0xf]
        %v634 = vld [vmem:[%s5 + $0x38] sm:$0xf]
        %v635 = vld [vmem:[%s5 + $0x3c] sm:$0xf]
        %v638 = vunpack.c.l.b16 %v599
        %v639 = vunpack.c.l.b16 %v600
        %v640 = vpack.c.b16 %v639, %v638
        %v658 = vunpack.c.l.b16 %v620
        %v659 = vunpack.c.l.b16 %v621
        %v660 = vunpack.c.l.b16 %v622
        %v661 = vunpack.c.l.b16 %v623
        %v662 = vunpack.c.l.b16 %v624
        %v663 = vunpack.c.l.b16 %v625
        %v664 = vunpack.c.l.b16 %v626
        %v665 = vunpack.c.l.b16 %v627
        %v666 = vunpack.c.l.b16 %v628
        %v667 = vunpack.c.l.b16 %v629
        %v668 = vunpack.c.l.b16 %v630
        %v669 = vunpack.c.l.b16 %v631
        %v670 = vunpack.c.l.b16 %v632
        %v671 = vunpack.c.l.b16 %v633
        %v672 = vunpack.c.l.b16 %v634
        %v673 = vunpack.c.l.b16 %v635
        %v674 = vpack.c.b16 %v659, %v658
        %v675 = vpack.c.b16 %v661, %v660
        %v676 = vpack.c.b16 %v663, %v662
        %v677 = vpack.c.b16 %v665, %v664
        %v678 = vpack.c.b16 %v667, %v666
        %v679 = vpack.c.b16 %v669, %v668
        %v680 = vpack.c.b16 %v671, %v670
        %v681 = vpack.c.b16 %v673, %v672
        %690 = vmatprep.subr.bf16.mxu0 0
        %691 = vmatpush1.bf16.msra.mxu0 %v674
        %692 = vmatprep.subr.bf16.mxu0 0
        %693 = vmatpush1.bf16.msra.mxu0 %v675
        %694 = vmatprep.subr.bf16.mxu0 0
        %695 = vmatpush1.bf16.msra.mxu0 %v676
        %696 = vmatprep.subr.bf16.mxu0 0
        %697 = vmatpush1.bf16.msra.mxu0 %v677
        %698 = vmatprep.subr.bf16.mxu0 0
        %699 = vmatpush1.bf16.msra.mxu0 %v678
        %700 = vmatprep.subr.bf16.mxu0 0
        %701 = vmatpush1.bf16.msra.mxu0 %v679
        %702 = vmatprep.subr.bf16.mxu0 0
        %703 = vmatpush1.bf16.msra.mxu0 %v680
        %704 = vmatprep.subr.bf16.mxu0 0
        %705 = vmatpush1.bf16.msra.mxu0 %v681
        %706 = vmatprep.subr.bf16.mxu0 0
        %707 = vmatpush1.bf16.msra.mxu0 0
        %708 = vmatprep.subr.bf16.mxu0 0
        %709 = vmatpush1.bf16.msra.mxu0 0
        %710 = vmatprep.subr.bf16.mxu0 0
        %711 = vmatpush1.bf16.msra.mxu0 0
        %712 = vmatprep.subr.bf16.mxu0 0
        %713 = vmatpush1.bf16.msra.mxu0 0
        %714 = vmatprep.subr.bf16.mxu0 0
        %715 = vmatpush1.bf16.msra.mxu0 0
        %716 = vmatprep.subr.bf16.mxu0 0
        %717 = vmatpush1.bf16.msra.mxu0 0
        %718 = vmatprep.subr.bf16.mxu0 0
        %719 = vmatpush1.bf16.msra.mxu0 0
        %720 = vmatprep.subr.bf16.mxu0 0
        %721 = vmatpush1.bf16.msra.mxu0 0
        %722 = vmatprep.mubr.bf16.mxu0 0
        %723 = vmatmul.mubr.bf16.gmra.mrb[0].mxu0 %v640
        %v724 = vpop.f32.mrb[0].mxu0
        %v725 = vadd.f32 0.0, %v724
        %v726 = vpop.f32.mrb[0].mxu0
        %v727 = vpop.f32.mrb[0].mxu0
        %v728 = vadd.f32 0.0, %v727
        %v729 = vpop.f32.mrb[0].mxu0
        %730 = vdwg.mxu0
        %v733 = vunpack.c.l.b16 %v597
        %v734 = vunpack.c.l.b16 %v598
        %v735 = vpack.c.b16 %v734, %v733
        %v753 = vunpack.c.l.b16 %v604
        %v754 = vunpack.c.l.b16 %v605
        %v755 = vunpack.c.l.b16 %v606
        %v756 = vunpack.c.l.b16 %v607
        %v757 = vunpack.c.l.b16 %v608
        %v758 = vunpack.c.l.b16 %v609
        %v759 = vunpack.c.l.b16 %v610
        %v760 = vunpack.c.l.b16 %v611
        %v761 = vunpack.c.l.b16 %v612
        %v762 = vunpack.c.l.b16 %v613
        %v763 = vunpack.c.l.b16 %v614
        %v764 = vunpack.c.l.b16 %v615
        %v765 = vunpack.c.l.b16 %v616
        %v766 = vunpack.c.l.b16 %v617
        %v767 = vunpack.c.l.b16 %v618
        %v768 = vunpack.c.l.b16 %v619
        %v769 = vpack.c.b16 %v754, %v753
        %v770 = vpack.c.b16 %v756, %v755
        %v771 = vpack.c.b16 %v758, %v757
        %v772 = vpack.c.b16 %v760, %v759
        %v773 = vpack.c.b16 %v762, %v761
        %v774 = vpack.c.b16 %v764, %v763
        %v775 = vpack.c.b16 %v766, %v765
        %v776 = vpack.c.b16 %v768, %v767
        %785 = vmatprep.subr.bf16.mxu0 0
        %786 = vmatpush1.bf16.msra.mxu0 %v769
        %787 = vmatprep.subr.bf16.mxu0 0
        %788 = vmatpush1.bf16.msra.mxu0 %v770
        %789 = vmatprep.subr.bf16.mxu0 0
        %790 = vmatpush1.bf16.msra.mxu0 %v771
        %791 = vmatprep.subr.bf16.mxu0 0
        %792 = vmatpush1.bf16.msra.mxu0 %v772
        %793 = vmatprep.subr.bf16.mxu0 0
        %794 = vmatpush1.bf16.msra.mxu0 %v773
        %795 = vmatprep.subr.bf16.mxu0 0
        %796 = vmatpush1.bf16.msra.mxu0 %v774
        %797 = vmatprep.subr.bf16.mxu0 0
        %798 = vmatpush1.bf16.msra.mxu0 %v775
        %799 = vmatprep.subr.bf16.mxu0 0
        %800 = vmatpush1.bf16.msra.mxu0 %v776
        %801 = vmatprep.subr.bf16.mxu0 0
        %802 = vmatpush1.bf16.msra.mxu0 0
        %803 = vmatprep.subr.bf16.mxu0 0
        %804 = vmatpush1.bf16.msra.mxu0 0
        %805 = vmatprep.subr.bf16.mxu0 0
        %806 = vmatpush1.bf16.msra.mxu0 0
        %807 = vmatprep.subr.bf16.mxu0 0
        %808 = vmatpush1.bf16.msra.mxu0 0
        %809 = vmatprep.subr.bf16.mxu0 0
        %810 = vmatpush1.bf16.msra.mxu0 0
        %811 = vmatprep.subr.bf16.mxu0 0
        %812 = vmatpush1.bf16.msra.mxu0 0
        %813 = vmatprep.subr.bf16.mxu0 0
        %814 = vmatpush1.bf16.msra.mxu0 0
        %815 = vmatprep.subr.bf16.mxu0 0
        %816 = vmatpush1.bf16.msra.mxu0 0
        %817 = vmatprep.mubr.bf16.mxu0 0
        %818 = vmatmul.mubr.bf16.gmra.mrb[0].mxu0 %v735
        %v819 = vpop.f32.mrb[0].mxu0
        %v820 = vadd.f32 %v725, %v819
        %v821 = vpop.f32.mrb[0].mxu0
        %v822 = vpop.f32.mrb[0].mxu0
        %v823 = vadd.f32 %v728, %v822
        %v824 = vpop.f32.mrb[0].mxu0
        %825 = vdwg.mxu0
        %v826 = vld [vmem:[%s6] sm:$0xf]
        %v827 = vld [vmem:[%s6 + $0x4] sm:$0xf]
        %v828 = vld [vmem:[%s6 + $0x8] sm:$0xf]
        %v829 = vld [vmem:[%s6 + $0xc] sm:$0xf]
        %v830 = vld [vmem:[%s6 + $0x10] sm:$0xf]
        %v831 = vld [vmem:[%s6 + $0x14] sm:$0xf]
        %v832 = vld [vmem:[%s6 + $0x18] sm:$0xf]
        %v833 = vld [vmem:[%s6 + $0x1c] sm:$0xf]
        %v834 = vld [vmem:[%s6 + $0x20] sm:$0xf]
        %v835 = vld [vmem:[%s6 + $0x24] sm:$0xf]
        %v836 = vld [vmem:[%s6 + $0x28] sm:$0xf]
        %v837 = vld [vmem:[%s6 + $0x2c] sm:$0xf]
        %v838 = vld [vmem:[%s6 + $0x30] sm:$0xf]
        %v839 = vld [vmem:[%s6 + $0x34] sm:$0xf]
        %v840 = vld [vmem:[%s6 + $0x38] sm:$0xf]
        %v841 = vld [vmem:[%s6 + $0x3c] sm:$0xf]
        %v844 = vunpack.c.l.b16 %v601
        %v845 = vunpack.c.l.b16 %v602
        %v846 = vpack.c.b16 %v845, %v844
        %v864 = vunpack.c.l.b16 %v826
        %v865 = vunpack.c.l.b16 %v827
        %v866 = vunpack.c.l.b16 %v828
        %v867 = vunpack.c.l.b16 %v829
        %v868 = vunpack.c.l.b16 %v830
        %v869 = vunpack.c.l.b16 %v831
        %v870 = vunpack.c.l.b16 %v832
        %v871 = vunpack.c.l.b16 %v833
        %v872 = vunpack.c.l.b16 %v834
        %v873 = vunpack.c.l.b16 %v835
        %v874 = vunpack.c.l.b16 %v836
        %v875 = vunpack.c.l.b16 %v837
        %v876 = vunpack.c.l.b16 %v838
        %v877 = vunpack.c.l.b16 %v839
        %v878 = vunpack.c.l.b16 %v840
        %v879 = vunpack.c.l.b16 %v841
        %v880 = vpack.c.b16 %v865, %v864
        %v881 = vpack.c.b16 %v867, %v866
        %v882 = vpack.c.b16 %v869, %v868
        %v883 = vpack.c.b16 %v871, %v870
        %v884 = vpack.c.b16 %v873, %v872
        %v885 = vpack.c.b16 %v875, %v874
        %v886 = vpack.c.b16 %v877, %v876
        %v887 = vpack.c.b16 %v879, %v878
        %896 = vmatprep.subr.bf16.mxu0 0
        %897 = vmatpush1.bf16.msra.mxu0 %v880
        %898 = vmatprep.subr.bf16.mxu0 0
        %899 = vmatpush1.bf16.msra.mxu0 %v881
        %900 = vmatprep.subr.bf16.mxu0 0
        %901 = vmatpush1.bf16.msra.mxu0 %v882
        %902 = vmatprep.subr.bf16.mxu0 0
        %903 = vmatpush1.bf16.msra.mxu0 %v883
        %904 = vmatprep.subr.bf16.mxu0 0
        %905 = vmatpush1.bf16.msra.mxu0 %v884
        %906 = vmatprep.subr.bf16.mxu0 0
        %907 = vmatpush1.bf16.msra.mxu0 %v885
        %908 = vmatprep.subr.bf16.mxu0 0
        %909 = vmatpush1.bf16.msra.mxu0 %v886
        %910 = vmatprep.subr.bf16.mxu0 0
        %911 = vmatpush1.bf16.msra.mxu0 %v887
        %912 = vmatprep.subr.bf16.mxu0 0
        %913 = vmatpush1.bf16.msra.mxu0 0
        %914 = vmatprep.subr.bf16.mxu0 0
        %915 = vmatpush1.bf16.msra.mxu0 0
        %916 = vmatprep.subr.bf16.mxu0 0
        %917 = vmatpush1.bf16.msra.mxu0 0
        %918 = vmatprep.subr.bf16.mxu0 0
        %919 = vmatpush1.bf16.msra.mxu0 0
        %920 = vmatprep.subr.bf16.mxu0 0
        %921 = vmatpush1.bf16.msra.mxu0 0
        %922 = vmatprep.subr.bf16.mxu0 0
        %923 = vmatpush1.bf16.msra.mxu0 0
        %924 = vmatprep.subr.bf16.mxu0 0
        %925 = vmatpush1.bf16.msra.mxu0 0
        %926 = vmatprep.subr.bf16.mxu0 0
        %927 = vmatpush1.bf16.msra.mxu0 0
        %928 = vmatprep.mubr.bf16.mxu0 0
        %929 = vmatmul.mubr.bf16.gmra.mrb[0].mxu0 %v846
        %v930 = vpop.f32.mrb[0].mxu0
        %v931 = vadd.f32 0.0, %v930
        %v932 = vpop.f32.mrb[0].mxu0
        %v933 = vpop.f32.mrb[0].mxu0
        %v934 = vadd.f32 0.0, %v933
        %v935 = vpop.f32.mrb[0].mxu0
        %936 = vdwg.mxu0
        %v937 = vadd.f32 %v820, %v931
        %v938 = vadd.f32 %v823, %v934
        %v939 = vld [vmem:[%s7] sm:$0x1]
        %v941 = vlaneseq
        %v942 = vshrl.u32 %v941, 7
        %v943 = vsub.s32 0, %v942
        %v944 = vrot.slane %v939, %v943
        %v946 = vadd.f32 %v937, %v944
        %v947 = vadd.f32 %v938, %v944
        %v948 = vmax.f32 %v946, 0.0
        %v949 = vmax.f32 %v947, 0.0
        %950 = vmatprep.subr.bf16.mxu0 0
        %951 = vmatpush1.bf16.msra.mxu0 %v674
        %952 = vmatprep.subr.bf16.mxu0 0
        %953 = vmatpush1.bf16.msra.mxu0 %v675
        %954 = vmatprep.subr.bf16.mxu0 0
        %955 = vmatpush1.bf16.msra.mxu0 %v676
        %956 = vmatprep.subr.bf16.mxu0 0
        %957 = vmatpush1.bf16.msra.mxu0 %v677
        %958 = vmatprep.subr.bf16.mxu0 0
        %959 = vmatpush1.bf16.msra.mxu0 %v678
        %960 = vmatprep.subr.bf16.mxu0 0
        %961 = vmatpush1.bf16.msra.mxu0 %v679
        %962 = vmatprep.subr.bf16.mxu0 0
        %963 = vmatpush1.bf16.msra.mxu0 %v680
        %964 = vmatprep.subr.bf16.mxu0 0
        %965 = vmatpush1.bf16.msra.mxu0 %v681
        %966 = vmatprep.subr.bf16.mxu0 0
        %967 = vmatpush1.bf16.msra.mxu0 0
        %968 = vmatprep.subr.bf16.mxu0 0
        %969 = vmatpush1.bf16.msra.mxu0 0
        %970 = vmatprep.subr.bf16.mxu0 0
        %971 = vmatpush1.bf16.msra.mxu0 0
        %972 = vmatprep.subr.bf16.mxu0 0
        %973 = vmatpush1.bf16.msra.mxu0 0
        %974 = vmatprep.subr.bf16.mxu0 0
        %975 = vmatpush1.bf16.msra.mxu0 0
        %976 = vmatprep.subr.bf16.mxu0 0
        %977 = vmatpush1.bf16.msra.mxu0 0
        %978 = vmatprep.subr.bf16.mxu0 0
        %979 = vmatpush1.bf16.msra.mxu0 0
        %980 = vmatprep.subr.bf16.mxu0 0
        %981 = vmatpush1.bf16.msra.mxu0 0
        %982 = vmatprep.mubr.bf16.mxu0 0
        %983 = vmatmul.mubr.bf16.gmra.mrb[0].mxu0 %v603
        %v984 = vpop.f32.mrb[0].mxu0
        %v985 = vadd.f32 0.0, %v984
        %v986 = vpop.f32.mrb[0].mxu0
        %v987 = vpop.f32.mrb[0].mxu0
        %v988 = vpop.f32.mrb[0].mxu0
        %989 = vdwg.mxu0
        %990 = vmatprep.subr.bf16.mxu0 0
        %991 = vmatpush1.bf16.msra.mxu0 %v769
        %992 = vmatprep.subr.bf16.mxu0 0
        %993 = vmatpush1.bf16.msra.mxu0 %v770
        %994 = vmatprep.subr.bf16.mxu0 0
        %995 = vmatpush1.bf16.msra.mxu0 %v771
        %996 = vmatprep.subr.bf16.mxu0 0
        %997 = vmatpush1.bf16.msra.mxu0 %v772
        %998 = vmatprep.subr.bf16.mxu0 0
        %999 = vmatpush1.bf16.msra.mxu0 %v773
        %1000 = vmatprep.subr.bf16.mxu0 0
        %1001 = vmatpush1.bf16.msra.mxu0 %v774
        %1002 = vmatprep.subr.bf16.mxu0 0
        %1003 = vmatpush1.bf16.msra.mxu0 %v775
        %1004 = vmatprep.subr.bf16.mxu0 0
        %1005 = vmatpush1.bf16.msra.mxu0 %v776
        %1006 = vmatprep.subr.bf16.mxu0 0
        %1007 = vmatpush1.bf16.msra.mxu0 0
        %1008 = vmatprep.subr.bf16.mxu0 0
        %1009 = vmatpush1.bf16.msra.mxu0 0
        %1010 = vmatprep.subr.bf16.mxu0 0
        %1011 = vmatpush1.bf16.msra.mxu0 0
        %1012 = vmatprep.subr.bf16.mxu0 0
        %1013 = vmatpush1.bf16.msra.mxu0 0
        %1014 = vmatprep.subr.bf16.mxu0 0
        %1015 = vmatpush1.bf16.msra.mxu0 0
        %1016 = vmatprep.subr.bf16.mxu0 0
        %1017 = vmatpush1.bf16.msra.mxu0 0
        %1018 = vmatprep.subr.bf16.mxu0 0
        %1019 = vmatpush1.bf16.msra.mxu0 0
        %1020 = vmatprep.subr.bf16.mxu0 0
        %1021 = vmatpush1.bf16.msra.mxu0 0
        %1022 = vmatprep.mubr.bf16.mxu0 0
        %1023 = vmatmul.mubr.bf16.gmra.mrb[0].mxu0 %v601
        %v1024 = vpop.f32.mrb[0].mxu0
        %v1025 = vadd.f32 %v985, %v1024
        %v1026 = vpop.f32.mrb[0].mxu0
        %v1027 = vpop.f32.mrb[0].mxu0
        %v1028 = vpop.f32.mrb[0].mxu0
        %1029 = vdwg.mxu0
        %v1031 = vshrl.u32 %v735, 16
        %v1033 = vshll.u32 %v735, 16
        %v1035 = vrot.slane %v1033, 1
        %v1036 = vor.u32 %v1031, %v1035
        %1038 = vmatprep.subr.bf16.mxu0 0
        %1039 = vmatpush1.bf16.msra.mxu0 %v880
        %1040 = vmatprep.subr.bf16.mxu0 0
        %1041 = vmatpush1.bf16.msra.mxu0 %v881
        %1042 = vmatprep.subr.bf16.mxu0 0
        %1043 = vmatpush1.bf16.msra.mxu0 %v882
        %1044 = vmatprep.subr.bf16.mxu0 0
        %1045 = vmatpush1.bf16.msra.mxu0 %v883
        %1046 = vmatprep.subr.bf16.mxu0 0
        %1047 = vmatpush1.bf16.msra.mxu0 %v884
        %1048 = vmatprep.subr.bf16.mxu0 0
        %1049 = vmatpush1.bf16.msra.mxu0 %v885
        %1050 = vmatprep.subr.bf16.mxu0 0
        %1051 = vmatpush1.bf16.msra.mxu0 %v886
        %1052 = vmatprep.subr.bf16.mxu0 0
        %1053 = vmatpush1.bf16.msra.mxu0 %v887
        %1054 = vmatprep.subr.bf16.mxu0 0
        %1055 = vmatpush1.bf16.msra.mxu0 0
        %1056 = vmatprep.subr.bf16.mxu0 0
        %1057 = vmatpush1.bf16.msra.mxu0 0
        %1058 = vmatprep.subr.bf16.mxu0 0
        %1059 = vmatpush1.bf16.msra.mxu0 0
        %1060 = vmatprep.subr.bf16.mxu0 0
        %1061 = vmatpush1.bf16.msra.mxu0 0
        %1062 = vmatprep.subr.bf16.mxu0 0
        %1063 = vmatpush1.bf16.msra.mxu0 0
        %1064 = vmatprep.subr.bf16.mxu0 0
        %1065 = vmatpush1.bf16.msra.mxu0 0
        %1066 = vmatprep.subr.bf16.mxu0 0
        %1067 = vmatpush1.bf16.msra.mxu0 0
        %1068 = vmatprep.subr.bf16.mxu0 0
        %1069 = vmatpush1.bf16.msra.mxu0 0
        %1070 = vmatprep.mubr.bf16.mxu0 0
        %1071 = vmatmul.mubr.bf16.gmra.mrb[0].mxu0 %v1036
        %v1072 = vpop.f32.mrb[0].mxu0
        %v1073 = vadd.f32 0.0, %v1072
        %v1074 = vpop.f32.mrb[0].mxu0
        %v1075 = vpop.f32.mrb[0].mxu0
        %v1076 = vpop.f32.mrb[0].mxu0
        %1077 = vdwg.mxu0
        %v1078 = vadd.f32 %v1025, %v1073
        %v1079 = vadd.f32 %v1078, %v944
        %v1080 = vmax.f32 %v1079, 0.0
        %v1081 = vpack.c.bf16 %v949, %v948
        %v1082 = vpack.c.bf16 %v1080, %v1080
        %v1083 = vld [vmem:[%s8] sm:$0xf]
        %v1084 = vld [vmem:[%s8 + $0x4] sm:$0xf]
        %v1085 = vld [vmem:[%s8 + $0x8] sm:$0xf]
        %v1086 = vld [vmem:[%s8 + $0xc] sm:$0xf]
        %v1087 = vld [vmem:[%s8 + $0x10] sm:$0xf]
        %v1088 = vld [vmem:[%s8 + $0x14] sm:$0xf]
        %v1089 = vld [vmem:[%s8 + $0x18] sm:$0xf]
        %v1090 = vld [vmem:[%s9] sm:$0xf]
        %v1091 = vld [vmem:[%s9 + $0x4] sm:$0xf]
        %v1092 = vld [vmem:[%s9 + $0x8] sm:$0xf]
        %v1093 = vld [vmem:[%s9 + $0xc] sm:$0xf]
        %v1094 = vld [vmem:[%s9 + $0x10] sm:$0xf]
        %v1095 = vld [vmem:[%s9 + $0x14] sm:$0xf]
        %v1096 = vld [vmem:[%s9 + $0x18] sm:$0xf]
        %v1104 = vunpack.c.l.b16 %v1090
        %v1105 = vunpack.c.l.b16 %v1091
        %v1106 = vunpack.c.l.b16 %v1092
        %v1107 = vunpack.c.l.b16 %v1093
        %v1108 = vunpack.c.l.b16 %v1094
        %v1109 = vunpack.c.l.b16 %v1095
        %v1110 = vunpack.c.l.b16 %v1096
        %v1111 = vpack.c.b16 %v1105, %v1104
        %v1112 = vpack.c.b16 %v1107, %v1106
        %v1113 = vpack.c.b16 %v1109, %v1108
        %v1114 = vpack.c.b16 %v1110, %v1110
        %vm1118 = vcmask 457728
        %v1120 = vsel %vm1118, %v1082, 0
        %vm1122 = vcmask 1043456
        %v1124 = vsel %vm1122, %v1114, 0
        %1126 = vmatprep.subr.bf16.mxu0 0
        %1127 = vmatpush1.bf16.msra.mxu0 %v1111
        %1128 = vmatprep.subr.bf16.mxu0 0
        %1129 = vmatpush1.bf16.msra.mxu0 %v1112
        %1130 = vmatprep.subr.bf16.mxu0 0
        %1131 = vmatpush1.bf16.msra.mxu0 %v1113
        %1132 = vmatprep.subr.bf16.mxu0 0
        %1133 = vmatpush1.bf16.msra.mxu0 %v1124
        %1134 = vmatprep.subr.bf16.mxu0 0
        %1135 = vmatpush1.bf16.msra.mxu0 0
        %1136 = vmatprep.subr.bf16.mxu0 0
        %1137 = vmatpush1.bf16.msra.mxu0 0
        %1138 = vmatprep.subr.bf16.mxu0 0
        %1139 = vmatpush1.bf16.msra.mxu0 0
        %1140 = vmatprep.subr.bf16.mxu0 0
        %1141 = vmatpush1.bf16.msra.mxu0 0
        %1142 = vmatprep.subr.bf16.mxu0 0
        %1143 = vmatpush1.bf16.msra.mxu0 0
        %1144 = vmatprep.subr.bf16.mxu0 0
        %1145 = vmatpush1.bf16.msra.mxu0 0
        %1146 = vmatprep.subr.bf16.mxu0 0
        %1147 = vmatpush1.bf16.msra.mxu0 0
        %1148 = vmatprep.subr.bf16.mxu0 0
        %1149 = vmatpush1.bf16.msra.mxu0 0
        %1150 = vmatprep.subr.bf16.mxu0 0
        %1151 = vmatpush1.bf16.msra.mxu0 0
        %1152 = vmatprep.subr.bf16.mxu0 0
        %1153 = vmatpush1.bf16.msra.mxu0 0
        %1154 = vmatprep.subr.bf16.mxu0 0
        %1155 = vmatpush1.bf16.msra.mxu0 0
        %1156 = vmatprep.subr.bf16.mxu0 0
        %1157 = vmatpush1.bf16.msra.mxu0 0
        %1158 = vmatprep.mubr.bf16.mxu0 0
        %1159 = vmatmul.mubr.bf16.gmra.mrb[0].mxu0 %v1120
        %v1160 = vpop.f32.mrb[0].mxu0
        %v1161 = vadd.f32 0.0, %v1160
        %v1162 = vpop.f32.mrb[0].mxu0
        %v1163 = vpop.f32.mrb[0].mxu0
        %v1164 = vpop.f32.mrb[0].mxu0
        %1165 = vdwg.mxu0
        %v1173 = vunpack.c.l.b16 %v1083
        %v1174 = vunpack.c.l.b16 %v1084
        %v1175 = vunpack.c.l.b16 %v1085
        %v1176 = vunpack.c.l.b16 %v1086
        %v1177 = vunpack.c.l.b16 %v1087
        %v1178 = vunpack.c.l.b16 %v1088
        %v1179 = vunpack.c.l.b16 %v1089
        %v1180 = vpack.c.b16 %v1174, %v1173
        %v1181 = vpack.c.b16 %v1176, %v1175
        %v1182 = vpack.c.b16 %v1178, %v1177
        %v1183 = vpack.c.b16 %v1179, %v1179
        %v1188 = vsel %vm1118, %v1081, 0
        %v1191 = vsel %vm1122, %v1183, 0
        %1193 = vmatprep.subr.bf16.mxu0 0
        %1194 = vmatpush1.bf16.msra.mxu0 %v1180
        %1195 = vmatprep.subr.bf16.mxu0 0
        %1196 = vmatpush1.bf16.msra.mxu0 %v1181
        %1197 = vmatprep.subr.bf16.mxu0 0
        %1198 = vmatpush1.bf16.msra.mxu0 %v1182
        %1199 = vmatprep.subr.bf16.mxu0 0
        %1200 = vmatpush1.bf16.msra.mxu0 %v1191
        %1201 = vmatprep.subr.bf16.mxu0 0
        %1202 = vmatpush1.bf16.msra.mxu0 0
        %1203 = vmatprep.subr.bf16.mxu0 0
        %1204 = vmatpush1.bf16.msra.mxu0 0
        %1205 = vmatprep.subr.bf16.mxu0 0
        %1206 = vmatpush1.bf16.msra.mxu0 0
        %1207 = vmatprep.subr.bf16.mxu0 0
        %1208 = vmatpush1.bf16.msra.mxu0 0
        %1209 = vmatprep.subr.bf16.mxu0 0
        %1210 = vmatpush1.bf16.msra.mxu0 0
        %1211 = vmatprep.subr.bf16.mxu0 0
        %1212 = vmatpush1.bf16.msra.mxu0 0
        %1213 = vmatprep.subr.bf16.mxu0 0
        %1214 = vmatpush1.bf16.msra.mxu0 0
        %1215 = vmatprep.subr.bf16.mxu0 0
        %1216 = vmatpush1.bf16.msra.mxu0 0
        %1217 = vmatprep.subr.bf16.mxu0 0
        %1218 = vmatpush1.bf16.msra.mxu0 0
        %1219 = vmatprep.subr.bf16.mxu0 0
        %1220 = vmatpush1.bf16.msra.mxu0 0
        %1221 = vmatprep.subr.bf16.mxu0 0
        %1222 = vmatpush1.bf16.msra.mxu0 0
        %1223 = vmatprep.subr.bf16.mxu0 0
        %1224 = vmatpush1.bf16.msra.mxu0 0
        %1225 = vmatprep.mubr.bf16.mxu0 0
        %1226 = vmatmul.mubr.bf16.gmra.mrb[0].mxu0 %v1188
        %v1227 = vpop.f32.mrb[0].mxu0
        %v1228 = vadd.f32 %v1161, %v1227
        %v1229 = vpop.f32.mrb[0].mxu0
        %v1230 = vpop.f32.mrb[0].mxu0
        %v1231 = vpop.f32.mrb[0].mxu0
        %1232 = vdwg.mxu0
        %v1233 = vld [vmem:[%s10] sm:$0xf]
        %v1234 = vld [vmem:[%s10 + $0x4] sm:$0xf]
        %v1235 = vld [vmem:[%s10 + $0x8] sm:$0xf]
        %v1236 = vld [vmem:[%s10 + $0xc] sm:$0xf]
        %v1237 = vld [vmem:[%s10 + $0x10] sm:$0xf]
        %v1238 = vld [vmem:[%s10 + $0x14] sm:$0xf]
        %v1239 = vld [vmem:[%s10 + $0x18] sm:$0xf]
        %v1240 = vshrl.u32 %v1081, 16
        %v1242 = vshll.u32 %v1081, 16
        %v1244 = vrot.slane %v1242, 1
        %v1245 = vor.u32 %v1240, %v1244
        %v1253 = vunpack.c.l.b16 %v1233
        %v1254 = vunpack.c.l.b16 %v1234
        %v1255 = vunpack.c.l.b16 %v1235
        %v1256 = vunpack.c.l.b16 %v1236
        %v1257 = vunpack.c.l.b16 %v1237
        %v1258 = vunpack.c.l.b16 %v1238
        %v1259 = vunpack.c.l.b16 %v1239
        %v1260 = vpack.c.b16 %v1254, %v1253
        %v1261 = vpack.c.b16 %v1256, %v1255
        %v1262 = vpack.c.b16 %v1258, %v1257
        %v1263 = vpack.c.b16 %v1259, %v1259
        %v1268 = vsel %vm1118, %v1245, 0
        %v1271 = vsel %vm1122, %v1263, 0
        %1273 = vmatprep.subr.bf16.mxu0 0
        %1274 = vmatpush1.bf16.msra.mxu0 %v1260
        %1275 = vmatprep.subr.bf16.mxu0 0
        %1276 = vmatpush1.bf16.msra.mxu0 %v1261
        %1277 = vmatprep.subr.bf16.mxu0 0
        %1278 = vmatpush1.bf16.msra.mxu0 %v1262
        %1279 = vmatprep.subr.bf16.mxu0 0
        %1280 = vmatpush1.bf16.msra.mxu0 %v1271
        %1281 = vmatprep.subr.bf16.mxu0 0
        %1282 = vmatpush1.bf16.msra.mxu0 0
        %1283 = vmatprep.subr.bf16.mxu0 0
        %1284 = vmatpush1.bf16.msra.mxu0 0
        %1285 = vmatprep.subr.bf16.mxu0 0
        %1286 = vmatpush1.bf16.msra.mxu0 0
        %1287 = vmatprep.subr.bf16.mxu0 0
        %1288 = vmatpush1.bf16.msra.mxu0 0
        %1289 = vmatprep.subr.bf16.mxu0 0
        %1290 = vmatpush1.bf16.msra.mxu0 0
        %1291 = vmatprep.subr.bf16.mxu0 0
        %1292 = vmatpush1.bf16.msra.mxu0 0
        %1293 = vmatprep.subr.bf16.mxu0 0
        %1294 = vmatpush1.bf16.msra.mxu0 0
        %1295 = vmatprep.subr.bf16.mxu0 0
        %1296 = vmatpush1.bf16.msra.mxu0 0
        %1297 = vmatprep.subr.bf16.mxu0 0
        %1298 = vmatpush1.bf16.msra.mxu0 0
        %1299 = vmatprep.subr.bf16.mxu0 0
        %1300 = vmatpush1.bf16.msra.mxu0 0
        %1301 = vmatprep.subr.bf16.mxu0 0
        %1302 = vmatpush1.bf16.msra.mxu0 0
        %1303 = vmatprep.subr.bf16.mxu0 0
        %1304 = vmatpush1.bf16.msra.mxu0 0
        %1305 = vmatprep.mubr.bf16.mxu0 0
        %1306 = vmatmul.mubr.bf16.gmra.mrb[0].mxu0 %v1268
        %v1307 = vpop.f32.mrb[0].mxu0
        %v1308 = vadd.f32 0.0, %v1307
        %v1309 = vpop.f32.mrb[0].mxu0
        %v1310 = vpop.f32.mrb[0].mxu0
        %v1311 = vpop.f32.mrb[0].mxu0
        %1312 = vdwg.mxu0
        %v1313 = vadd.f32 %v1228, %v1308
        %v1314 = vld [vmem:[%s11] sm:$0x1]
        %v1316 = vlaneseq
        %v1317 = vshrl.u32 %v1316, 7
        %v1318 = vsub.s32 0, %v1317
        %v1319 = vrot.slane %v1314, %v1318
        %v1321 = vadd.f32 %v1313, %v1319
        %v1322 = vmax.f32 %v1321, 0.0
        %v1323 = vpack.c.bf16 %v1322, %v1322
        %v1324 = vld [vmem:[%s12] sm:$0xff]
        %v1325 = vld [vmem:[%s12 + $0x8] sm:$0xff]
        %v1326 = vld [vmem:[%s12 + $0x10] sm:$0xff]
        %v1327 = vld [vmem:[%s13] sm:$0x3]
        %v1329 = vlaneseq
        %v1330 = vshrl.u32 %v1329, 7
        %v1331 = vsub.s32 0, %v1330
        %v1332 = vrot.slane %v1327, %v1331
        %v1333 = vlaneseq
        %v1334 = vshrl.u32 %v1333, 7
        %v1335 = vsub.s32 1, %v1334
        %v1336 = vrot.slane %v1327, %v1335
        %v1342 = vunpack.c.l.b16 %v1324
        %v1343 = vunpack.c.h.b16 %v1324
        %v1344 = vunpack.c.l.b16 %v1325
        %v1345 = vunpack.c.h.b16 %v1325
        %v1346 = vunpack.c.l.b16 %v1326
        %v1347 = vunpack.c.h.b16 %v1326
        %v1348 = vpack.c.b16 %v1344, %v1342
        %v1349 = vpack.c.b16 %v1345, %v1343
        %v1350 = vpack.c.b16 %v1346, %v1346
        %v1351 = vpack.c.b16 %v1347, %v1347
        %vm1354 = vcmask 195584
        %v1356 = vsel %vm1354, %v1323, 0
        %v1359 = vsel %vm1122, %v1350, 0
        %v1362 = vsel %vm1122, %v1351, 0
        %1364 = vmatprep.subr.bf16.mxu0 %v1349
        %1365 = vmatpush1.bf16.msra.mxu0 %v1348
        %1366 = vmatprep.subr.bf16.mxu0 %v1362
        %1367 = vmatpush1.bf16.msra.mxu0 %v1359
        %1368 = vmatprep.subr.bf16.mxu0 0
        %1369 = vmatpush1.bf16.msra.mxu0 0
        %1370 = vmatprep.subr.bf16.mxu0 0
        %1371 = vmatpush1.bf16.msra.mxu0 0
        %1372 = vmatprep.subr.bf16.mxu0 0
        %1373 = vmatpush1.bf16.msra.mxu0 0
        %1374 = vmatprep.subr.bf16.mxu0 0
        %1375 = vmatpush1.bf16.msra.mxu0 0
        %1376 = vmatprep.subr.bf16.mxu0 0
        %1377 = vmatpush1.bf16.msra.mxu0 0
        %1378 = vmatprep.subr.bf16.mxu0 0
        %1379 = vmatpush1.bf16.msra.mxu0 0
        %1380 = vmatprep.subr.bf16.mxu0 0
        %1381 = vmatpush1.bf16.msra.mxu0 0
        %1382 = vmatprep.subr.bf16.mxu0 0
        %1383 = vmatpush1.bf16.msra.mxu0 0
        %1384 = vmatprep.subr.bf16.mxu0 0
        %1385 = vmatpush1.bf16.msra.mxu0 0
        %1386 = vmatprep.subr.bf16.mxu0 0
        %1387 = vmatpush1.bf16.msra.mxu0 0
        %1388 = vmatprep.subr.bf16.mxu0 0
        %1389 = vmatpush1.bf16.msra.mxu0 0
        %1390 = vmatprep.subr.bf16.mxu0 0
        %1391 = vmatpush1.bf16.msra.mxu0 0
        %1392 = vmatprep.subr.bf16.mxu0 0
        %1393 = vmatpush1.bf16.msra.mxu0 0
        %1394 = vmatprep.subr.bf16.mxu0 0
        %1395 = vmatpush1.bf16.msra.mxu0 0
        %1396 = vmatprep.mubr.bf16.mxu0 0
        %1397 = vmatmul.mubr.bf16.gmra.mrb[0].mxu0 %v1356
        %v1398 = vpop.f32.mrb[0].mxu0
        %v1399 = vadd.f32 %v1332, %v1398
        %v1400 = vpop.f32.mrb[0].mxu0
        %v1401 = vadd.f32 %v1336, %v1400
        %v1402 = vpop.f32.mrb[0].mxu0
        %v1403 = vpop.f32.mrb[0].mxu0
        %1404 = vdwg.mxu0
        %1405 = vst [vmem:[%s559] sm:$0xff] %v1399
        %1406 = vst [vmem:[%s559 + $0x8] sm:$0xff] %v1401
        %s1407 = sand.u32 %s372, 1
        %s1408 = scalar_lea.sflag [#allocation3], %s1407
        %s1409 = sand.u32 %s372, 1
        %s1410 = smul.addr %s1409, 16
        %s1411 = scalar_lea.vmem [#allocation2], %s1410
        // Predicated region
        $region77: #{tpu_custom_call.1} parent=75 // pred_check
          %p1412 = pneg %p382
        $region78: #{tpu_custom_call.1} parent=75 // pred_check_branch
          %1414 = sbr.rel (%p1412) target = $region80
        $region79: #{tpu_custom_call.1} parent=75 // pred_region
          %s1416 = ssub.s32 256, 256
          %1417 = vsyncadd %s1408, %s1416
          %s1418 = smul.addr %s33, 2
          %s1419 = smul.addr %s32, 2
          %s1420 = sadd.s32 %s1418, %s1419
          %s1421 = smul.addr %s1420, 128
          %s1422 = scalar_lea.hbm %s14, %s1421
          %s1424 = sshll.u32 %s1411, 4
          %s1425 = int_to_ptr.vmem [resolvable:$true] %s1424
          %1427 = dma.vmem_to_hbm [thread:$0]  %s1425, 256, %s1422, %s1408
        $region80: #{tpu_custom_call.1} parent=75 // pred_fallthru
          _
      $region76: #{tpu_custom_call.1} parent=5 // pred_fallthru
        _
      %p1428 = scmp.le.s32.totalorder 2, %s23
      // Predicated region
      $region81: #{tpu_custom_call.1} parent=5 // pred_check
        %p1429 = pneg %p1428
      $region82: #{tpu_custom_call.1} parent=5 // pred_check_branch
        %1431 = sbr.rel (%p1429) target = $region84
      $region83: #{tpu_custom_call.1} parent=5 // pred_region
        %s1432 = ssub.s32 %s23, 2
        // Predicated region
        $region85: #{tpu_custom_call.1} parent=83 // pred_check
          %p1433 = pneg %p388
        $region86: #{tpu_custom_call.1} parent=83 // pred_check_branch
          %1435 = sbr.rel (%p1433) target = $region88
        $region87: #{tpu_custom_call.1} parent=83 // pred_region
          %s1436 = sand.u32 %s373, 1
          %s1437 = scalar_lea.sflag [#allocation3], %s1436
          %s1438 = sand.u32 %s373, 1
          %s1439 = smul.addr %s1438, 16
          %s1440 = scalar_lea.vmem [#allocation2], %s1439
          %1441 = dma.done %s1437, 256
        $region88: #{tpu_custom_call.1} parent=83 // pred_fallthru
          _
      $region84: #{tpu_custom_call.1} parent=5 // pred_fallthru
        _
    $region6: #{tpu_custom_call.1} parent=1 // loop_footer
      %s27 = sadd.s32 1, %s23
    $region7: #{tpu_custom_call.1} parent=1 // loop_footer_branch
      %22 = sbr.rel target = $region3
    $region8: #{tpu_custom_call.1} parent=1 // loop_exit
      _
    %1442 = vsyncpa [#allocation3], 1
    %s1443 = scalar_lea.sflag [#allocation3], 1
    %1444 = vsyncpa %s1443, 1

</llo_original>
